<compile_context>
chip_gen: v6e
topology: v6e:2x2x1
jax: 0.10.0
libtpu: 0.0.40
codegen_flags: <defaults>
</compile_context>

<pallas_src>
import math

import jax
import jax.numpy as jnp
from jax import lax
from jax.experimental import pallas as pl
from jax.experimental.pallas import tpu as pltpu

# relu(x_j + NEG_SENTINEL) == 0  =>  adjacency mask baked into E.
# NOTE: assumes finite node/edge features (NaN/Inf in inputs would leak through).
NEG_SENTINEL = -1e30


def _largest_divisor_leq(n, target, align=8):
    """Largest divisor of n that is <= target, preferring sublane-aligned (mult-of-8) ones."""
    target = max(1, min(int(target), n))
    fallback = 1
    for c in range(target, 0, -1):
        if n % c:
            continue
        if c % align == 0 or c == n:
            return c
        if fallback == 1:
            fallback = c
    return fallback


def _plan_tiling(n, h, e_itemsize, fixed_bytes):
    """Generation-aware VMEM plan -> (tile_dst, chunk_src, e_resident, vmem_limit)."""
    try:
        vmem_cap = int(pltpu.get_tpu_info().vmem_capacity_bytes)
    except Exception:
        vmem_cap = 0
    if not (32 << 20) <= vmem_cap <= (256 << 20):
        vmem_cap = 64 << 20                      # conservative fallback (v7x per-core VMEM)
    vmem_limit = min(max(32 << 20, int(vmem_cap * 0.75)), 100 << 20)
    avail = max(vmem_limit - fixed_bytes - (6 << 20), 4 << 20)   # headroom for compiler temps

    e_row = n * h * e_itemsize                   # one destination row of the dense E slab
    e_resident = n * e_row <= int(avail * 0.7)   # single-copy residency in a VMEM scratch
    if e_resident:
        tile_dst = _largest_divisor_leq(n, 256)  # only bounds the VPU working set
    else:
        # double-buffered E tile must fit in ~70% of what is left
        tile_dst = _largest_divisor_leq(n, max(int(avail * 0.35) // e_row, 8))
    # per-source-chunk temporaries (~6 B/elem: bf16 msg + f32 cast) capped at ~4 MiB
    chunk_src = _largest_divisor_leq(n, max((4 << 20) // max(6 * tile_dst * h, 1), 8))
    return tile_dst, chunk_src, e_resident, vmem_limit


def _make_kernel(*, n, h, num_layers, tile_dst, chunk_src, e_resident):
    n_chunks = n // chunk_src

    def kernel(x0_hbm, e_in, w1_ref, b1_ref, w2_ref, b2_ref,
               p_ref, wc_ref, bc_ref, o_ref, *scratch):
        if e_resident:
            x_sc, pre_sc, e_vmem, sems = scratch
        else:
            x_sc, pre_sc, sems = scratch
            e_vmem = None

        l = pl.program_id(0)                  # layer index (outer, sequential)
        t = pl.program_id(1)                  # destination-node tile index (inner)
        last_tile = t == pl.num_programs(1) - 1

        # One-time staging: x0 -> x_sc[0]; if it fits, the whole E slab -> a single
        # VMEM copy (one DMA for the entire forward).
        @pl.when((l == 0) & (t == 0))
        def _():
            x_cp = pltpu.make_async_copy(x0_hbm, x_sc.at[0], sems.at[0])
            x_cp.start()
            if e_resident:
                e_cp = pltpu.make_async_copy(e_in, e_vmem, sems.at[1])
                e_cp.start()
                e_cp.wait()
            x_cp.wait()

        row0 = pl.multiple_of(t * tile_dst, tile_dst)

        def load_e_chunk(c0):
            if e_resident:
                return e_vmem[pl.ds(row0, tile_dst), pl.ds(c0, chunk_src), :]
            return e_in[:, pl.ds(c0, chunk_src), :]   # dst rows pre-windowed by BlockSpec

        def aggregate(src):
            """sum_j relu(x_j + e_ij) for this dst tile, chunked over source nodes."""
            def one_chunk(ci):
                c0 = pl.multiple_of(ci * chunk_src, chunk_src)
                xj = x_sc[src, pl.ds(c0, chunk_src), :].astype(jnp.bfloat16)   # (chunk, H)
                msg = jnp.maximum(load_e_chunk(c0) + xj[None, :, :], 0.0)      # bf16 VPU
                return jnp.sum(msg.astype(jnp.float32), axis=1)                # (tile, H) f32
            if n_chunks == 1:
                return one_chunk(0)
            return lax.fori_loop(0, n_chunks,
                                 lambda ci, acc: acc + one_chunk(ci),
                                 jnp.zeros((tile_dst, h), jnp.float32),
                                 unroll=n_chunks <= 4)

        def msg_phase(src):
            def body():
                x_dst = x_sc[src, pl.ds(row0, tile_dst), :]       # (tile, H) f32
                # GINEConv, eps = 0: (1 + eps) * x_i + sum_j relu(x_j + e_ij)
                pre_sc[pl.ds(row0, tile_dst), :] = x_dst + aggregate(src)
            return body

        pl.when(l % 2 == 0)(msg_phase(0))
        pl.when(l % 2 == 1)(msg_phase(1))

        # MLP (Linear -> ReLU -> Linear) + post-layer ReLU, hoisted to once per layer
        # over all N rows (full-M MXU matmuls).  Dropout(0.1) is identity at inference.
        def mlp_phase(dst):
            def body():
                pre = pre_sc[...].astype(jnp.bfloat16)
                h1 = jnp.maximum(
                    jnp.dot(pre, w1_ref[...], preferred_element_type=jnp.float32)
                    + b1_ref[...], 0.0)
                h2 = jnp.dot(h1.astype(jnp.bfloat16), w2_ref[...],
                             preferred_element_type=jnp.float32) + b2_ref[...]
                x_sc[dst, :, :] = jnp.maximum(h2, 0.0)
            return body

        pl.when(last_tile & (l % 2 == 0))(mlp_phase(1))
        pl.when(last_tile & (l % 2 == 1))(mlp_phase(0))

        # After the last tile of the last layer: mean-pool + classify (all VMEM-resident).
        @pl.when(last_tile & (l == num_layers - 1))
        def _():
            x_final = x_sc[num_layers % 2]                            # (N, H) f32
            pooled = jnp.dot(p_ref[...], x_final,
                             preferred_element_type=jnp.float32)      # (B, H)
            o_ref[...] = jnp.dot(pooled, wc_ref[...],
                                 preferred_element_type=jnp.float32) + bc_ref[...]

    return kernel


def eeg_connectome_gnn_forward(params, x0, e_dense, pool_mat):
    """Fused forward pass.

    x0:       (N, H)    f32   node features (GINEConv requires input_dim == hidden_dim)
    e_dense:  (N, N, H) bf16  dense edge attrs; e_dense[i, j] = attr of edge j->i,
                              NEG_SENTINEL for non-edges (adjacency mask baked in)
    pool_mat: (B, N)    f32   per-graph mean-pool matrix
    """
    n, h = x0.shape
    num_layers, h_in, h_out = params["w1"].shape
    b = pool_mat.shape[0]
    c = params["wc"].shape[1]
    assert h_in == h and h_out == h and params["w2"].shape[1:] == (h, h), (
        "GINEConv requires input_dim == hidden_dim (edge attr dim == node feature dim)")
    assert e_dense.shape == (n, n, h)

    # persistent VMEM besides the E slab: x ping-pong + pre-MLP scratch + weight blocks
    fixed_bytes = (3 * n * h * 4                       # x_sc (2,N,H) + pre_sc (N,H), f32
                   + 2 * (2 * h * h * 2 + 2 * h * 4)   # W1/W2 (bf16) + b1/b2, 2 buffers
                   + b * n * 4 + h * c * 4 + c * 4)    # pool matrix + classifier
    tile_dst, chunk_src, e_resident, vmem_limit = _plan_tiling(
        n, h, e_dense.dtype.itemsize, fixed_bytes)
    n_tiles = n // tile_dst

    # bf16 weight staging: single-pass bf16 MXU matmuls + half the weight DMA
    w1 = params["w1"].astype(jnp.bfloat16)
    w2 = params["w2"].astype(jnp.bfloat16)

    kernel = _make_kernel(n=n, h=h, num_layers=num_layers, tile_dst=tile_dst,
                          chunk_src=chunk_src, e_resident=e_resident)

    if e_resident:
        e_spec = pl.BlockSpec(memory_space=pl.ANY)     # one-shot manual DMA, single copy
    else:
        e_spec = pl.BlockSpec((tile_dst, n, h), lambda l, t: (t, 0, 0))

    scratch_shapes = [pltpu.VMEM((2, n, h), jnp.float32),    # node-feature ping-pong
                      pltpu.VMEM((n, h), jnp.float32)]       # pre-MLP aggregate
    if e_resident:
        scratch_shapes.append(pltpu.VMEM((n, n, h), e_dense.dtype))
    scratch_shapes.append(pltpu.SemaphoreType.DMA((2,)))

    grid_spec = pltpu.PrefetchScalarGridSpec(
        num_scalar_prefetch=0,
        grid=(num_layers, n_tiles),
        in_specs=[
            pl.BlockSpec(memory_space=pl.ANY),                    # x0 (one-shot DMA)
            e_spec,                                               # E (resident or tiled)
            pl.BlockSpec((None, h, h), lambda l, t: (l, 0, 0)),   # W1[l]  (bf16)
            pl.BlockSpec((None, 1, h), lambda l, t: (l, 0, 0)),   # b1[l]
            pl.BlockSpec((None, h, h), lambda l, t: (l, 0, 0)),   # W2[l]  (bf16)
            pl.BlockSpec((None, 1, h), lambda l, t: (l, 0, 0)),   # b2[l]
            pl.BlockSpec((b, n), lambda l, t: (0, 0)),            # mean-pool matrix
            pl.BlockSpec((h, c), lambda l, t: (0, 0)),            # Wc
            pl.BlockSpec((1, c), lambda l, t: (0, 0)),            # bc
        ],
        out_specs=pl.BlockSpec((b, c), lambda l, t: (0, 0)),
        scratch_shapes=scratch_shapes,
    )

    e_bytes = e_dense.size * e_dense.dtype.itemsize
    cost = pl.CostEstimate(
        flops=int(num_layers * (3 * n * n * h + 4 * n * h * h)
                  + 2 * b * n * h + 2 * b * h * c),
        transcendentals=0,
        bytes_accessed=int(e_bytes * (1 if e_resident else num_layers)
                           + x0.size * 4
                           + w1.size * 2 + w2.size * 2
                           + (params["b1"].size + params["b2"].size) * 4
                           + pool_mat.size * 4 + params["wc"].size * 4 + b * c * 4),
    )

    fused = pl.pallas_call(
        kernel,
        out_shape=jax.ShapeDtypeStruct((b, c), jnp.float32),
        grid_spec=grid_spec,
        compiler_params=pltpu.CompilerParams(
            # both axes carry the cross-step scratch dependency -> "arbitrary"
            dimension_semantics=("arbitrary", "arbitrary"),
            vmem_limit_bytes=int(vmem_limit),
        ),
        cost_estimate=cost,
    )
    return fused(x0, e_dense, w1, params["b1"], w2, params["b2"],
                 pool_mat, params["wc"], params["bc"])


if __name__ == "__main__":
    key = jax.random.PRNGKey(0)

    num_graphs = 2
    nodes_per_graph = 8
    n_nodes = num_graphs * nodes_per_graph
    hidden_dim = 128        # module default; == input_dim (GINEConv edge-dim requirement)
    input_dim = hidden_dim  # also makes the message phase lane-dense (last dim = 128)
    num_classes = 3
    num_layers = 4

    keys = jax.random.split(key, 2 + 2 * num_layers + 1)

    # synthetic bidirectional ring graphs (unique edges, no self-loops)
    src_list, dst_list = [], []
    for g in range(num_graphs):
        off = g * nodes_per_graph
        for j in range(nodes_per_graph):
            u = off + j
            v = off + (j + 1) % nodes_per_graph
            src_list += [u, v]
            dst_list += [v, u]
    src = jnp.array(src_list, dtype=jnp.int32)
    dst = jnp.array(dst_list, dtype=jnp.int32)
    num_edges = int(src.shape[0])

    x0 = jax.random.normal(keys[0], (n_nodes, input_dim), jnp.float32)
    edge_attr = jax.random.normal(keys[1], (num_edges, input_dim), jnp.float32)

    # Densify (plain-JAX glue): E[i, j] = attr of edge j->i, NEG_SENTINEL for non-edges.
    e_dense = jnp.full((n_nodes, n_nodes, input_dim), NEG_SENTINEL, jnp.float32)
    e_dense = e_dense.at[dst, src].set(edge_attr).astype(jnp.bfloat16)

    # global_mean_pool as a (B, N) matrix
    batch = jnp.repeat(jnp.arange(num_graphs), nodes_per_graph)
    onehot = (batch[None, :] == jnp.arange(num_graphs)[:, None]).astype(jnp.float32)
    pool_mat = onehot / onehot.sum(axis=1, keepdims=True)

    # parameters: torch.nn.Linear default init, stacked per layer
    def init_linear(k, fan_in, fan_out):
        kw, kb = jax.random.split(k)
        bound = 1.0 / math.sqrt(fan_in)
        w = jax.random.uniform(kw, (fan_in, fan_out), jnp.float32, -bound, bound)
        bias = jax.random.uniform(kb, (1, fan_out), jnp.float32, -bound, bound)
        return w, bias

    w1s, b1s, w2s, b2s = [], [], [], []
    kidx = 2
    for i in range(num_layers):
        fin = input_dim if i == 0 else hidden_dim
        w1, b1 = init_linear(keys[kidx], fin, hidden_dim); kidx += 1
        w2, b2 = init_linear(keys[kidx], hidden_dim, hidden_dim); kidx += 1
        w1s.append(w1); b1s.append(b1); w2s.append(w2); b2s.append(b2)
    wc, bc = init_linear(keys[kidx], hidden_dim, num_classes)

    params = {
        "w1": jnp.stack(w1s), "b1": jnp.stack(b1s),
        "w2": jnp.stack(w2s), "b2": jnp.stack(b2s),
        "wc": wc, "bc": bc,
    }

    logits = eeg_connectome_gnn_forward(params, x0, e_dense, pool_mat)
    logits = jax.block_until_ready(logits)

    # plain-JAX f32 reference on the same densified (bf16-rounded) E
    def reference(params, x, e_bf16, pmat):
        e = e_bf16.astype(jnp.float32)
        for i in range(params["w1"].shape[0]):
            msg = jnp.maximum(x[None, :, :] + e, 0.0)
            hcur = x + msg.sum(axis=1)
            hcur = jnp.maximum(hcur @ params["w1"][i] + params["b1"][i], 0.0)
            hcur = hcur @ params["w2"][i] + params["b2"][i]
            x = jnp.maximum(hcur, 0.0)
        return (pmat @ x) @ params["wc"] + params["bc"]

    ref = reference(params, x0, e_dense, pool_mat)

    assert logits.shape == (num_graphs, num_classes)
    assert bool(jnp.all(jnp.isfinite(logits)))
    assert bool(jnp.allclose(logits, ref, rtol=5e-2, atol=1e-1))
    print("KERNEL_OK")
</pallas_src>

<mosaic_0001>
module attributes {stable_mosaic.version = 11 : i64} {
  func.func @kernel(%arg0: i32, %arg1: i32, %arg2: memref<16x128xf32, #tpu.memory_space<any>>, %arg3: memref<16x16x128xbf16, #tpu.memory_space<any>>, %arg4: memref<1x128x128xbf16, #tpu.memory_space<vmem>>, %arg5: memref<1x1x128xf32, #tpu.memory_space<vmem>>, %arg6: memref<1x128x128xbf16, #tpu.memory_space<vmem>>, %arg7: memref<1x1x128xf32, #tpu.memory_space<vmem>>, %arg8: memref<2x16xf32, #tpu.memory_space<vmem>>, %arg9: memref<128x3xf32, #tpu.memory_space<vmem>>, %arg10: memref<1x3xf32, #tpu.memory_space<vmem>>, %arg11: memref<2x3xf32, #tpu.memory_space<vmem>>, %arg12: memref<2x16x128xf32, #tpu.memory_space<vmem>>, %arg13: memref<16x128xf32, #tpu.memory_space<vmem>>, %arg14: memref<16x16x128xbf16, #tpu.memory_space<vmem>>, %arg15: memref<2x!tpu.dma_semaphore, #tpu.memory_space<semaphore_mem>>) attributes {dimension_semantics = [#tpu.dimension_semantics<arbitrary>, #tpu.dimension_semantics<arbitrary>], iteration_bounds = array<i64: 4, 1>, scalar_prefetch = 0 : i64, scratch_operands = 4 : i64, tpu.core_type = #tpu.core_type<tc>, window_params = [{}, {}, {transform_indices = @transform_2, window_bounds = array<i64: 1, 128, 128>}, {transform_indices = @transform_3, window_bounds = array<i64: 1, 1, 128>}, {transform_indices = @transform_4, window_bounds = array<i64: 1, 128, 128>}, {transform_indices = @transform_5, window_bounds = array<i64: 1, 1, 128>}, {pipeline_mode = #tpu.pipeline_mode<synchronous>, transform_indices = @transform_6, window_bounds = array<i64: 2, 16>}, {pipeline_mode = #tpu.pipeline_mode<synchronous>, transform_indices = @transform_7, window_bounds = array<i64: 128, 3>}, {pipeline_mode = #tpu.pipeline_mode<synchronous>, transform_indices = @transform_8, window_bounds = array<i64: 1, 3>}, {pipeline_mode = #tpu.pipeline_mode<synchronous>, transform_indices = @transform_9, window_bounds = array<i64: 2, 3>}]} {
    %c0_i32 = arith.constant 0 : i32
    %0 = arith.cmpi eq, %arg1, %c0_i32 : i32
    %c0_i32_0 = arith.constant 0 : i32
    %1 = arith.cmpi eq, %arg0, %c0_i32_0 : i32
    %c0_i32_1 = arith.constant 0 : i32
    %2 = arith.cmpi eq, %arg1, %c0_i32_1 : i32
    %3 = arith.andi %1, %2 : i1
    %4 = arith.extui %3 : i1 to i32
    %c0_i32_2 = arith.constant 0 : i32
    %5 = arith.cmpi ne, %4, %c0_i32_2 : i32
    scf.if %5 {
      %c0_i32_34 = arith.constant 0 : i32
      %c0_i32_35 = arith.constant 0 : i32
      %c0_i32_36 = arith.constant 0 : i32
      %c0_i32_37 = arith.constant 0 : i32
      %66 = tpu.memref_slice %arg12[%c0_i32_34, %c0_i32_36, %c0_i32_37] : memref<2x16x128xf32, #tpu.memory_space<vmem>> -> memref<1x16x128xf32, #tpu.memory_space<vmem>>
      %67 = tpu.memref_squeeze %66 : memref<1x16x128xf32, #tpu.memory_space<vmem>> -> memref<16x128xf32, #tpu.memory_space<vmem>>
      %68 = tpu.memref_slice %arg15[%c0_i32_35] : memref<2x!tpu.dma_semaphore, #tpu.memory_space<semaphore_mem>> -> memref<1x!tpu.dma_semaphore, #tpu.memory_space<semaphore_mem>>
      %69 = tpu.memref_squeeze %68 : memref<1x!tpu.dma_semaphore, #tpu.memory_space<semaphore_mem>> -> memref<!tpu.dma_semaphore, #tpu.memory_space<semaphore_mem>>
      tpu.enqueue_dma source(%arg2 : memref<16x128xf32, #tpu.memory_space<any>>) target(%67 : memref<16x128xf32, #tpu.memory_space<vmem>>) target_semaphore(%69 : memref<!tpu.dma_semaphore, #tpu.memory_space<semaphore_mem>>)
      %c1_i32_38 = arith.constant 1 : i32
      %70 = tpu.memref_slice %arg15[%c1_i32_38] : memref<2x!tpu.dma_semaphore, #tpu.memory_space<semaphore_mem>> -> memref<1x!tpu.dma_semaphore, #tpu.memory_space<semaphore_mem>>
      %71 = tpu.memref_squeeze %70 : memref<1x!tpu.dma_semaphore, #tpu.memory_space<semaphore_mem>> -> memref<!tpu.dma_semaphore, #tpu.memory_space<semaphore_mem>>
      tpu.enqueue_dma source(%arg3 : memref<16x16x128xbf16, #tpu.memory_space<any>>) target(%arg14 : memref<16x16x128xbf16, #tpu.memory_space<vmem>>) target_semaphore(%71 : memref<!tpu.dma_semaphore, #tpu.memory_space<semaphore_mem>>)
      %c1_i32_39 = arith.constant 1 : i32
      %72 = tpu.memref_slice %arg15[%c1_i32_39] : memref<2x!tpu.dma_semaphore, #tpu.memory_space<semaphore_mem>> -> memref<1x!tpu.dma_semaphore, #tpu.memory_space<semaphore_mem>>
      %73 = tpu.memref_squeeze %72 : memref<1x!tpu.dma_semaphore, #tpu.memory_space<semaphore_mem>> -> memref<!tpu.dma_semaphore, #tpu.memory_space<semaphore_mem>>
      tpu.wait_dma2 semaphore(%73 : memref<!tpu.dma_semaphore, #tpu.memory_space<semaphore_mem>>) src(%arg3 : memref<16x16x128xbf16, #tpu.memory_space<any>>) dst(%arg14 : memref<16x16x128xbf16, #tpu.memory_space<vmem>>)
      %c0_i32_40 = arith.constant 0 : i32
      %c0_i32_41 = arith.constant 0 : i32
      %c0_i32_42 = arith.constant 0 : i32
      %c0_i32_43 = arith.constant 0 : i32
      %74 = tpu.memref_slice %arg12[%c0_i32_40, %c0_i32_42, %c0_i32_43] : memref<2x16x128xf32, #tpu.memory_space<vmem>> -> memref<1x16x128xf32, #tpu.memory_space<vmem>>
      %75 = tpu.memref_squeeze %74 : memref<1x16x128xf32, #tpu.memory_space<vmem>> -> memref<16x128xf32, #tpu.memory_space<vmem>>
      %76 = tpu.memref_slice %arg15[%c0_i32_41] : memref<2x!tpu.dma_semaphore, #tpu.memory_space<semaphore_mem>> -> memref<1x!tpu.dma_semaphore, #tpu.memory_space<semaphore_mem>>
      %77 = tpu.memref_squeeze %76 : memref<1x!tpu.dma_semaphore, #tpu.memory_space<semaphore_mem>> -> memref<!tpu.dma_semaphore, #tpu.memory_space<semaphore_mem>>
      tpu.wait_dma2 semaphore(%77 : memref<!tpu.dma_semaphore, #tpu.memory_space<semaphore_mem>>) src(%arg2 : memref<16x128xf32, #tpu.memory_space<any>>) dst(%75 : memref<16x128xf32, #tpu.memory_space<vmem>>)
    } else {
    }
    %c16_i32 = arith.constant 16 : i32
    %6 = arith.muli %arg1, %c16_i32 : i32
    %7 = tpu.assume_multiple %6, 16 : i32
    %c2_i32 = arith.constant 2 : i32
    %c0_i32_3 = arith.constant 0 : i32
    %8 = arith.cmpi eq, %c2_i32, %c0_i32_3 : i32
    %c1_i32 = arith.constant 1 : i32
    %9 = arith.select %8, %c1_i32, %c2_i32 : i32
    %10 = arith.remsi %arg0, %9 : i32
    %c0_i32_4 = arith.constant 0 : i32
    %11 = arith.cmpi ne, %10, %c0_i32_4 : i32
    %c0_i32_5 = arith.constant 0 : i32
    %12 = arith.cmpi slt, %10, %c0_i32_5 : i32
    %c0_i32_6 = arith.constant 0 : i32
    %13 = arith.cmpi slt, %9, %c0_i32_6 : i32
    %14 = arith.xori %12, %13 : i1
    %15 = arith.andi %14, %11 : i1
    %16 = arith.addi %10, %9 : i32
    %17 = arith.select %15, %16, %10 : i32
    %c0_i32_7 = arith.constant 0 : i32
    %18 = arith.cmpi eq, %17, %c0_i32_7 : i32
    %19 = arith.extui %18 : i1 to i32
    %c0_i32_8 = arith.constant 0 : i32
    %20 = arith.cmpi ne, %19, %c0_i32_8 : i32
    scf.if %20 {
      %c0 = arith.constant 0 : index
      %66 = arith.index_cast %7 : i32 to index
      %c0_34 = arith.constant 0 : index
      %67 = vector.load %arg12[%c0, %66, %c0_34] : memref<2x16x128xf32, #tpu.memory_space<vmem>>, vector<1x16x128xf32>
      %68 = vector.shape_cast %67 : vector<1x16x128xf32> to vector<16x128xf32>
      %c0_i32_35 = arith.constant 0 : i32
      %69 = tpu.assume_multiple %c0_i32_35, 16 : i32
      %c0_36 = arith.constant 0 : index
      %70 = arith.index_cast %69 : i32 to index
      %c0_37 = arith.constant 0 : index
      %71 = vector.load %arg12[%c0_36, %70, %c0_37] : memref<2x16x128xf32, #tpu.memory_space<vmem>>, vector<1x16x128xf32>
      %72 = vector.shape_cast %71 : vector<1x16x128xf32> to vector<16x128xf32>
      %73 = arith.truncf %72 : vector<16x128xf32> to vector<16x128xbf16>
      %74 = arith.index_cast %7 : i32 to index
      %75 = arith.index_cast %69 : i32 to index
      %c0_38 = arith.constant 0 : index
      %76 = vector.load %arg14[%74, %75, %c0_38] : memref<16x16x128xbf16, #tpu.memory_space<vmem>>, vector<16x16x128xbf16>
      %77 = vector.shape_cast %73 : vector<16x128xbf16> to vector<1x16x128xbf16>
      %78 = vector.broadcast %77 : vector<1x16x128xbf16> to vector<16x16x128xbf16>
      %79 = arith.addf %76, %78 : vector<16x16x128xbf16>
      %cst = arith.constant 0.000000e+00 : bf16
      %80 = vector.broadcast %cst : bf16 to vector<16x16x128xbf16>
      %81 = arith.maximumf %79, %80 : vector<16x16x128xbf16>
      %82 = arith.extf %81 : vector<16x16x128xbf16> to vector<16x16x128xf32>
      %cst_39 = arith.constant dense<0.000000e+00> : vector<16x128xf32>
      %83 = vector.multi_reduction <add>, %82, %cst_39 [1] : vector<16x16x128xf32> to vector<16x128xf32>
      %84 = arith.addf %68, %83 : vector<16x128xf32>
      %85 = arith.index_cast %7 : i32 to index
      %c0_40 = arith.constant 0 : index
      %86 = vector.load %arg13[%85, %c0_40] : memref<16x128xf32, #tpu.memory_space<vmem>>, vector<16x128xf32>
      tpu.vector_store %arg13[%85, %c0_40], %84 {strides = array<i32>} : memref<16x128xf32, #tpu.memory_space<vmem>>, vector<16x128xf32>,
    } else {
    }
    %c2_i32_9 = arith.constant 2 : i32
    %c0_i32_10 = arith.constant 0 : i32
    %21 = arith.cmpi eq, %c2_i32_9, %c0_i32_10 : i32
    %c1_i32_11 = arith.constant 1 : i32
    %22 = arith.select %21, %c1_i32_11, %c2_i32_9 : i32
    %23 = arith.remsi %arg0, %22 : i32
    %c0_i32_12 = arith.constant 0 : i32
    %24 = arith.cmpi ne, %23, %c0_i32_12 : i32
    %c0_i32_13 = arith.constant 0 : i32
    %25 = arith.cmpi slt, %23, %c0_i32_13 : i32
    %c0_i32_14 = arith.constant 0 : i32
    %26 = arith.cmpi slt, %22, %c0_i32_14 : i32
    %27 = arith.xori %25, %26 : i1
    %28 = arith.andi %27, %24 : i1
    %29 = arith.addi %23, %22 : i32
    %30 = arith.select %28, %29, %23 : i32
    %c1_i32_15 = arith.constant 1 : i32
    %31 = arith.cmpi eq, %30, %c1_i32_15 : i32
    %32 = arith.extui %31 : i1 to i32
    %c0_i32_16 = arith.constant 0 : i32
    %33 = arith.cmpi ne, %32, %c0_i32_16 : i32
    scf.if %33 {
      %c1 = arith.constant 1 : index
      %66 = arith.index_cast %7 : i32 to index
      %c0 = arith.constant 0 : index
      %67 = vector.load %arg12[%c1, %66, %c0] : memref<2x16x128xf32, #tpu.memory_space<vmem>>, vector<1x16x128xf32>
      %68 = vector.shape_cast %67 : vector<1x16x128xf32> to vector<16x128xf32>
      %c0_i32_34 = arith.constant 0 : i32
      %69 = tpu.assume_multiple %c0_i32_34, 16 : i32
      %c1_35 = arith.constant 1 : index
      %70 = arith.index_cast %69 : i32 to index
      %c0_36 = arith.constant 0 : index
      %71 = vector.load %arg12[%c1_35, %70, %c0_36] : memref<2x16x128xf32, #tpu.memory_space<vmem>>, vector<1x16x128xf32>
      %72 = vector.shape_cast %71 : vector<1x16x128xf32> to vector<16x128xf32>
      %73 = arith.truncf %72 : vector<16x128xf32> to vector<16x128xbf16>
      %74 = arith.index_cast %7 : i32 to index
      %75 = arith.index_cast %69 : i32 to index
      %c0_37 = arith.constant 0 : index
      %76 = vector.load %arg14[%74, %75, %c0_37] : memref<16x16x128xbf16, #tpu.memory_space<vmem>>, vector<16x16x128xbf16>
      %77 = vector.shape_cast %73 : vector<16x128xbf16> to vector<1x16x128xbf16>
      %78 = vector.broadcast %77 : vector<1x16x128xbf16> to vector<16x16x128xbf16>
      %79 = arith.addf %76, %78 : vector<16x16x128xbf16>
      %cst = arith.constant 0.000000e+00 : bf16
      %80 = vector.broadcast %cst : bf16 to vector<16x16x128xbf16>
      %81 = arith.maximumf %79, %80 : vector<16x16x128xbf16>
      %82 = arith.extf %81 : vector<16x16x128xbf16> to vector<16x16x128xf32>
      %cst_38 = arith.constant dense<0.000000e+00> : vector<16x128xf32>
      %83 = vector.multi_reduction <add>, %82, %cst_38 [1] : vector<16x16x128xf32> to vector<16x128xf32>
      %84 = arith.addf %68, %83 : vector<16x128xf32>
      %85 = arith.index_cast %7 : i32 to index
      %c0_39 = arith.constant 0 : index
      %86 = vector.load %arg13[%85, %c0_39] : memref<16x128xf32, #tpu.memory_space<vmem>>, vector<16x128xf32>
      tpu.vector_store %arg13[%85, %c0_39], %84 {strides = array<i32>} : memref<16x128xf32, #tpu.memory_space<vmem>>, vector<16x128xf32>,
    } else {
    }
    %c2_i32_17 = arith.constant 2 : i32
    %c0_i32_18 = arith.constant 0 : i32
    %34 = arith.cmpi eq, %c2_i32_17, %c0_i32_18 : i32
    %c1_i32_19 = arith.constant 1 : i32
    %35 = arith.select %34, %c1_i32_19, %c2_i32_17 : i32
    %36 = arith.remsi %arg0, %35 : i32
    %c0_i32_20 = arith.constant 0 : i32
    %37 = arith.cmpi ne, %36, %c0_i32_20 : i32
    %c0_i32_21 = arith.constant 0 : i32
    %38 = arith.cmpi slt, %36, %c0_i32_21 : i32
    %c0_i32_22 = arith.constant 0 : i32
    %39 = arith.cmpi slt, %35, %c0_i32_22 : i32
    %40 = arith.xori %38, %39 : i1
    %41 = arith.andi %40, %37 : i1
    %42 = arith.addi %36, %35 : i32
    %43 = arith.select %41, %42, %36 : i32
    %c0_i32_23 = arith.constant 0 : i32
    %44 = arith.cmpi eq, %43, %c0_i32_23 : i32
    %45 = arith.andi %0, %44 : i1
    %46 = arith.extui %45 : i1 to i32
    %c0_i32_24 = arith.constant 0 : i32
    %47 = arith.cmpi ne, %46, %c0_i32_24 : i32
    scf.if %47 {
      %c0 = arith.constant 0 : index
      %c0_34 = arith.constant 0 : index
      %66 = vector.load %arg13[%c0, %c0_34] : memref<16x128xf32, #tpu.memory_space<vmem>>, vector<16x128xf32>
      %67 = arith.truncf %66 : vector<16x128xf32> to vector<16x128xbf16>
      %c0_35 = arith.constant 0 : index
      %c0_36 = arith.constant 0 : index
      %c0_37 = arith.constant 0 : index
      %68 = vector.load %arg4[%c0_35, %c0_36, %c0_37] : memref<1x128x128xbf16, #tpu.memory_space<vmem>>, vector<1x128x128xbf16>
      %69 = vector.shape_cast %68 : vector<1x128x128xbf16> to vector<128x128xbf16>
      %cst = arith.constant dense<0.000000e+00> : vector<16x128xf32>
      %70 = tpu.matmul %67, %69, %cst {dimension_numbers = #tpu.dot_dimension_numbers<[1], [0], [0], [1], [0, 0, 1, 1], [], []>} : vector<16x128xbf16>, vector<128x128xbf16>, vector<16x128xf32> -> vector<16x128xf32>
      %c0_38 = arith.constant 0 : index
      %c0_39 = arith.constant 0 : index
      %c0_40 = arith.constant 0 : index
      %71 = vector.load %arg5[%c0_38, %c0_39, %c0_40] : memref<1x1x128xf32, #tpu.memory_space<vmem>>, vector<1x1x128xf32>
      %72 = vector.shape_cast %71 : vector<1x1x128xf32> to vector<1x128xf32>
      %73 = vector.broadcast %72 : vector<1x128xf32> to vector<16x128xf32>
      %74 = arith.addf %70, %73 : vector<16x128xf32>
      %cst_41 = arith.constant 0.000000e+00 : f32
      %75 = vector.broadcast %cst_41 : f32 to vector<16x128xf32>
      %76 = arith.maximumf %74, %75 : vector<16x128xf32>
      %77 = arith.truncf %76 : vector<16x128xf32> to vector<16x128xbf16>
      %c0_42 = arith.constant 0 : index
      %c0_43 = arith.constant 0 : index
      %c0_44 = arith.constant 0 : index
      %78 = vector.load %arg6[%c0_42, %c0_43, %c0_44] : memref<1x128x128xbf16, #tpu.memory_space<vmem>>, vector<1x128x128xbf16>
      %79 = vector.shape_cast %78 : vector<1x128x128xbf16> to vector<128x128xbf16>
      %cst_45 = arith.constant dense<0.000000e+00> : vector<16x128xf32>
      %80 = tpu.matmul %77, %79, %cst_45 {dimension_numbers = #tpu.dot_dimension_numbers<[1], [0], [0], [1], [0, 0, 1, 1], [], []>} : vector<16x128xbf16>, vector<128x128xbf16>, vector<16x128xf32> -> vector<16x128xf32>
      %c0_46 = arith.constant 0 : index
      %c0_47 = arith.constant 0 : index
      %c0_48 = arith.constant 0 : index
      %81 = vector.load %arg7[%c0_46, %c0_47, %c0_48] : memref<1x1x128xf32, #tpu.memory_space<vmem>>, vector<1x1x128xf32>
      %82 = vector.shape_cast %81 : vector<1x1x128xf32> to vector<1x128xf32>
      %83 = vector.broadcast %82 : vector<1x128xf32> to vector<16x128xf32>
      %84 = arith.addf %80, %83 : vector<16x128xf32>
      %cst_49 = arith.constant 0.000000e+00 : f32
      %85 = vector.broadcast %cst_49 : f32 to vector<16x128xf32>
      %86 = arith.maximumf %84, %85 : vector<16x128xf32>
      %c1 = arith.constant 1 : index
      %c0_50 = arith.constant 0 : index
      %c0_51 = arith.constant 0 : index
      %87 = vector.load %arg12[%c1, %c0_50, %c0_51] : memref<2x16x128xf32, #tpu.memory_space<vmem>>, vector<1x16x128xf32>
      %88 = vector.shape_cast %87 : vector<1x16x128xf32> to vector<16x128xf32>
      %89 = vector.shape_cast %86 : vector<16x128xf32> to vector<1x16x128xf32>
      tpu.vector_store %arg12[%c1, %c0_50, %c0_51], %89 {strides = array<i32>} : memref<2x16x128xf32, #tpu.memory_space<vmem>>, vector<1x16x128xf32>,
    } else {
    }
    %c2_i32_25 = arith.constant 2 : i32
    %c0_i32_26 = arith.constant 0 : i32
    %48 = arith.cmpi eq, %c2_i32_25, %c0_i32_26 : i32
    %c1_i32_27 = arith.constant 1 : i32
    %49 = arith.select %48, %c1_i32_27, %c2_i32_25 : i32
    %50 = arith.remsi %arg0, %49 : i32
    %c0_i32_28 = arith.constant 0 : i32
    %51 = arith.cmpi ne, %50, %c0_i32_28 : i32
    %c0_i32_29 = arith.constant 0 : i32
    %52 = arith.cmpi slt, %50, %c0_i32_29 : i32
    %c0_i32_30 = arith.constant 0 : i32
    %53 = arith.cmpi slt, %49, %c0_i32_30 : i32
    %54 = arith.xori %52, %53 : i1
    %55 = arith.andi %54, %51 : i1
    %56 = arith.addi %50, %49 : i32
    %57 = arith.select %55, %56, %50 : i32
    %c1_i32_31 = arith.constant 1 : i32
    %58 = arith.cmpi eq, %57, %c1_i32_31 : i32
    %59 = arith.andi %0, %58 : i1
    %60 = arith.extui %59 : i1 to i32
    %c0_i32_32 = arith.constant 0 : i32
    %61 = arith.cmpi ne, %60, %c0_i32_32 : i32
    scf.if %61 {
      %c0 = arith.constant 0 : index
      %c0_34 = arith.constant 0 : index
      %66 = vector.load %arg13[%c0, %c0_34] : memref<16x128xf32, #tpu.memory_space<vmem>>, vector<16x128xf32>
      %67 = arith.truncf %66 : vector<16x128xf32> to vector<16x128xbf16>
      %c0_35 = arith.constant 0 : index
      %c0_36 = arith.constant 0 : index
      %c0_37 = arith.constant 0 : index
      %68 = vector.load %arg4[%c0_35, %c0_36, %c0_37] : memref<1x128x128xbf16, #tpu.memory_space<vmem>>, vector<1x128x128xbf16>
      %69 = vector.shape_cast %68 : vector<1x128x128xbf16> to vector<128x128xbf16>
      %cst = arith.constant dense<0.000000e+00> : vector<16x128xf32>
      %70 = tpu.matmul %67, %69, %cst {dimension_numbers = #tpu.dot_dimension_numbers<[1], [0], [0], [1], [0, 0, 1, 1], [], []>} : vector<16x128xbf16>, vector<128x128xbf16>, vector<16x128xf32> -> vector<16x128xf32>
      %c0_38 = arith.constant 0 : index
      %c0_39 = arith.constant 0 : index
      %c0_40 = arith.constant 0 : index
      %71 = vector.load %arg5[%c0_38, %c0_39, %c0_40] : memref<1x1x128xf32, #tpu.memory_space<vmem>>, vector<1x1x128xf32>
      %72 = vector.shape_cast %71 : vector<1x1x128xf32> to vector<1x128xf32>
      %73 = vector.broadcast %72 : vector<1x128xf32> to vector<16x128xf32>
      %74 = arith.addf %70, %73 : vector<16x128xf32>
      %cst_41 = arith.constant 0.000000e+00 : f32
      %75 = vector.broadcast %cst_41 : f32 to vector<16x128xf32>
      %76 = arith.maximumf %74, %75 : vector<16x128xf32>
      %77 = arith.truncf %76 : vector<16x128xf32> to vector<16x128xbf16>
      %c0_42 = arith.constant 0 : index
      %c0_43 = arith.constant 0 : index
      %c0_44 = arith.constant 0 : index
      %78 = vector.load %arg6[%c0_42, %c0_43, %c0_44] : memref<1x128x128xbf16, #tpu.memory_space<vmem>>, vector<1x128x128xbf16>
      %79 = vector.shape_cast %78 : vector<1x128x128xbf16> to vector<128x128xbf16>
      %cst_45 = arith.constant dense<0.000000e+00> : vector<16x128xf32>
      %80 = tpu.matmul %77, %79, %cst_45 {dimension_numbers = #tpu.dot_dimension_numbers<[1], [0], [0], [1], [0, 0, 1, 1], [], []>} : vector<16x128xbf16>, vector<128x128xbf16>, vector<16x128xf32> -> vector<16x128xf32>
      %c0_46 = arith.constant 0 : index
      %c0_47 = arith.constant 0 : index
      %c0_48 = arith.constant 0 : index
      %81 = vector.load %arg7[%c0_46, %c0_47, %c0_48] : memref<1x1x128xf32, #tpu.memory_space<vmem>>, vector<1x1x128xf32>
      %82 = vector.shape_cast %81 : vector<1x1x128xf32> to vector<1x128xf32>
      %83 = vector.broadcast %82 : vector<1x128xf32> to vector<16x128xf32>
      %84 = arith.addf %80, %83 : vector<16x128xf32>
      %cst_49 = arith.constant 0.000000e+00 : f32
      %85 = vector.broadcast %cst_49 : f32 to vector<16x128xf32>
      %86 = arith.maximumf %84, %85 : vector<16x128xf32>
      %c0_50 = arith.constant 0 : index
      %c0_51 = arith.constant 0 : index
      %c0_52 = arith.constant 0 : index
      %87 = vector.load %arg12[%c0_50, %c0_51, %c0_52] : memref<2x16x128xf32, #tpu.memory_space<vmem>>, vector<1x16x128xf32>
      %88 = vector.shape_cast %87 : vector<1x16x128xf32> to vector<16x128xf32>
      %89 = vector.shape_cast %86 : vector<16x128xf32> to vector<1x16x128xf32>
      tpu.vector_store %arg12[%c0_50, %c0_51, %c0_52], %89 {strides = array<i32>} : memref<2x16x128xf32, #tpu.memory_space<vmem>>, vector<1x16x128xf32>,
    } else {
    }
    %c3_i32 = arith.constant 3 : i32
    %62 = arith.cmpi eq, %arg0, %c3_i32 : i32
    %63 = arith.andi %0, %62 : i1
    %64 = arith.extui %63 : i1 to i32
    %c0_i32_33 = arith.constant 0 : i32
    %65 = arith.cmpi ne, %64, %c0_i32_33 : i32
    scf.if %65 {
      %c0 = arith.constant 0 : index
      %c0_34 = arith.constant 0 : index
      %c0_35 = arith.constant 0 : index
      %66 = vector.load %arg12[%c0, %c0_34, %c0_35] : memref<2x16x128xf32, #tpu.memory_space<vmem>>, vector<1x16x128xf32>
      %67 = vector.shape_cast %66 : vector<1x16x128xf32> to vector<16x128xf32>
      %c0_36 = arith.constant 0 : index
      %c0_37 = arith.constant 0 : index
      %68 = vector.load %arg8[%c0_36, %c0_37] : memref<2x16xf32, #tpu.memory_space<vmem>>, vector<2x16xf32>
      %cst = arith.constant dense<0.000000e+00> : vector<2x128xf32>
      %69 = tpu.matmul %68, %67, %cst {dimension_numbers = #tpu.dot_dimension_numbers<[1], [0], [0], [1], [0, 0, 1, 1], [], []>} : vector<2x16xf32>, vector<16x128xf32>, vector<2x128xf32> -> vector<2x128xf32>
      %c0_38 = arith.constant 0 : index
      %c0_39 = arith.constant 0 : index
      %70 = vector.load %arg9[%c0_38, %c0_39] : memref<128x3xf32, #tpu.memory_space<vmem>>, vector<128x3xf32>
      %cst_40 = arith.constant dense<0.000000e+00> : vector<2x3xf32>
      %71 = tpu.matmul %69, %70, %cst_40 {dimension_numbers = #tpu.dot_dimension_numbers<[1], [0], [0], [1], [0, 0, 1, 1], [], []>} : vector<2x128xf32>, vector<128x3xf32>, vector<2x3xf32> -> vector<2x3xf32>
      %c0_41 = arith.constant 0 : index
      %c0_42 = arith.constant 0 : index
      %72 = vector.load %arg10[%c0_41, %c0_42] : memref<1x3xf32, #tpu.memory_space<vmem>>, vector<1x3xf32>
      %73 = vector.broadcast %72 : vector<1x3xf32> to vector<2x3xf32>
      %74 = arith.addf %71, %73 : vector<2x3xf32>
      %c0_43 = arith.constant 0 : index
      %c0_44 = arith.constant 0 : index
      %75 = vector.load %arg11[%c0_43, %c0_44] : memref<2x3xf32, #tpu.memory_space<vmem>>, vector<2x3xf32>
      tpu.vector_store %arg11[%c0_43, %c0_44], %74 {strides = array<i32>} : memref<2x3xf32, #tpu.memory_space<vmem>>, vector<2x3xf32>,
    } else {
    }
    return
  }
  func.func @transform_2(%arg0: i32, %arg1: i32) -> (i32, i32, i32) {
    %c0_i32 = arith.constant 0 : i32
    %c0_i32_0 = arith.constant 0 : i32
    %c0_i32_1 = arith.constant 0 : i32
    return %arg0, %c0_i32, %c0_i32_0 : i32, i32, i32
  }
  func.func @transform_3(%arg0: i32, %arg1: i32) -> (i32, i32, i32) {
    %c0_i32 = arith.constant 0 : i32
    %c0_i32_0 = arith.constant 0 : i32
    %c0_i32_1 = arith.constant 0 : i32
    return %arg0, %c0_i32, %c0_i32_0 : i32, i32, i32
  }
  func.func @transform_4(%arg0: i32, %arg1: i32) -> (i32, i32, i32) {
    %c0_i32 = arith.constant 0 : i32
    %c0_i32_0 = arith.constant 0 : i32
    %c0_i32_1 = arith.constant 0 : i32
    return %arg0, %c0_i32, %c0_i32_0 : i32, i32, i32
  }
  func.func @transform_5(%arg0: i32, %arg1: i32) -> (i32, i32, i32) {
    %c0_i32 = arith.constant 0 : i32
    %c0_i32_0 = arith.constant 0 : i32
    %c0_i32_1 = arith.constant 0 : i32
    return %arg0, %c0_i32, %c0_i32_0 : i32, i32, i32
  }
  func.func @transform_6(%arg0: i32, %arg1: i32) -> (i32, i32) {
    %c0_i32 = arith.constant 0 : i32
    %c0_i32_0 = arith.constant 0 : i32
    %c0_i32_1 = arith.constant 0 : i32
    return %c0_i32, %c0_i32_0 : i32, i32
  }
  func.func @transform_7(%arg0: i32, %arg1: i32) -> (i32, i32) {
    %c0_i32 = arith.constant 0 : i32
    %c0_i32_0 = arith.constant 0 : i32
    %c0_i32_1 = arith.constant 0 : i32
    return %c0_i32, %c0_i32_0 : i32, i32
  }
  func.func @transform_8(%arg0: i32, %arg1: i32) -> (i32, i32) {
    %c0_i32 = arith.constant 0 : i32
    %c0_i32_0 = arith.constant 0 : i32
    %c0_i32_1 = arith.constant 0 : i32
    return %c0_i32, %c0_i32_0 : i32, i32
  }
  func.func @transform_9(%arg0: i32, %arg1: i32) -> (i32, i32) {
    %c0_i32 = arith.constant 0 : i32
    %c0_i32_0 = arith.constant 0 : i32
    %c0_i32_1 = arith.constant 0 : i32
    return %c0_i32, %c0_i32_0 : i32, i32
  }
}

</mosaic_0001>

<llo_original>
// kernel: tpu_custom_call.1
$region0: #{tpu_custom_call.1}
  #allocation0 [shape = 'u32[]', space=smem, size = 0x4, offset = 0x4, fixed_abs, tag = 'smem constant byte address 0x4 - core index']
  #allocation1 [shape = 'u32[144,128]{1,0:T(1,128)}', space=vmem, size = 0x12000, scoped, tag = 'internal scratch']
  #allocation2 [shape = 'f32[2,16,128]{2,1,0:T(8,128)}', space=vmem, size = 0x4000, scoped, tag = 'scratch operand']
  #allocation3 [shape = 'f32[16,128]{1,0:T(8,128)}', space=vmem, size = 0x2000, scoped, tag = 'scratch operand']
  #allocation4 [shape = 'bf16[16,16,128]{2,1,0:T(8,128)(2,1)}', space=vmem, size = 0x10000, scoped, tag = 'scratch operand']
  #allocation5 [shape = 's32[2]{0}', space=sflag, size = 0x8, scoped, tag = 'scratch operand']
  #allocation12 [shape = 's32[]', space=sflag, size = 0x4, offset = 0, fixed_abs, tag = 'sflag constant byte address 0x0 - dummy sync flag']
  #allocation13 [shape = 's32[]', space=sflag, size = 0x4, offset = 0, fixed_abs, tag = 'sflag constant byte address 0x0 - dummy sync flag']
  #allocation14 [shape = 'u32[]', space=smem, size = 0x4, offset = 0x44, fixed_abs, tag = 'smem constant byte address 0x44 - assertion arg 0']
  #allocation15 [shape = 'u32[]', space=smem, size = 0x4, offset = 0x48, fixed_abs, tag = 'smem constant byte address 0x48 - assertion arg 1']
  #allocation16 [shape = 's32[]', space=sflag, size = 0x4, offset = 0, fixed_abs, tag = 'sflag constant byte address 0x0 - dummy sync flag']
  %s0 = inlined_call_operand.hbm [shape: f32[16,128], index: 0, kind: input, shape index: {}]
  %s1 = inlined_call_operand.vmem [shape: bf16[16,16,128], index: 1, kind: input, shape index: {}]
  %s2 = inlined_call_operand.hbm [shape: bf16[4,128,128], index: 2, kind: input, shape index: {}]
  %s3 = inlined_call_operand.vmem [shape: f32[4,1,128], index: 3, kind: input, shape index: {}]
  %s4 = inlined_call_operand.hbm [shape: bf16[4,128,128], index: 4, kind: input, shape index: {}]
  %s5 = inlined_call_operand.vmem [shape: f32[4,1,128], index: 5, kind: input, shape index: {}]
  %s6 = inlined_call_operand.vmem [shape: f32[2,16], index: 6, kind: input, shape index: {}]
  %s7 = inlined_call_operand.vmem [shape: f32[128,3], index: 7, kind: input, shape index: {}]
  %s8 = inlined_call_operand.vmem [shape: f32[1,3], index: 8, kind: input, shape index: {}]
  %s9 = inlined_call_operand.hbm [shape: f32[2,3], index: 9, kind: output, shape index: {}]
  %s10 = sld [smem:[#allocation0]]
  $region131: #{tpu_custom_call.1} parent=0
    _
  %s12 = ssub.s32 1, %s10
  %s13 = scalar_select 0, %s12, %s10
  $region1: #{tpu_custom_call.1} parent=0
    #allocation6 [shape = 'u8[65536]{0}', space=vmem, size = 0x10000, scoped, tag = 'input window, operand 2']
    #allocation7 [shape = 's32[2]{0}', space=sflag, size = 0x8, scoped, tag = 'scoped memory for tpu_custom_call.1']
    #allocation8 [shape = 's32[2]{0}', space=sflag, size = 0x8, scoped, tag = 'scoped memory for tpu_custom_call.1']
    #allocation9 [shape = 'u8[65536]{0}', space=vmem, size = 0x10000, scoped, tag = 'input window, operand 4']
    #allocation10 [shape = 's32[2]{0}', space=sflag, size = 0x8, scoped, tag = 'scoped memory for tpu_custom_call.1']
    #allocation11 [shape = 'u8[1024]{0}', space=vmem, size = 0x400, scoped, tag = 'output window, operand 0, single buffered']
    %14 = vsyncpa [#allocation7], 0
    %s15 = scalar_lea.sflag [#allocation7], 1
    %16 = vsyncpa %s15, 0
    %17 = vsyncpa [#allocation10], 0
    %s18 = scalar_lea.sflag [#allocation10], 1
    %19 = vsyncpa %s18, 0
    %20 = vsyncpa [#allocation8], 0
    loop: start=0, step=1, limit=6
    $region2: #{tpu_custom_call.1} parent=1 // loop_pre_header
      _
    $region3: #{tpu_custom_call.1} parent=1 // loop_header
      %s22 = sphi 0, %s26
      %p23 = scmp.ge.s32.totalorder %s22, 6
      %s29 = sphi 0, %s41
      %s30 = sphi 0, %s37
      %s31 = sphi 0, %s29
      %s32 = sphi 0, %s30
      %s33 = sphi 0, %s31
      %s34 = sphi 0, %s32
      %s44 = sphi 0, %s46
      %s47 = sphi 0, %s44
      %s48 = sphi 0, %s47
      %s64 = sphi 0, %s48
      %s70 = sphi 0, %s72
      %s73 = sphi 0, %s70
      %s74 = sphi 0, %s73
      %s90 = sphi 0, %s74
      %s96 = sphi 0, %s98
      %s99 = sphi 0, %s96
      %s100 = sphi 0, %s99
      %s116 = sphi 0, %s100
      %s122 = sphi 0, %s124
      %s125 = sphi 0, %s122
      %s126 = sphi 0, %s125
      %s142 = sphi 0, %s126
      %s146 = sphi 0, %s146
      %s148 = sphi 0, %s146
      %s149 = sphi 0, %s148
      %s163 = sphi 0, %s149
      %s167 = sphi 0, %s167
      %s169 = sphi 0, %s167
      %s170 = sphi 0, %s169
      %s184 = sphi 0, %s170
      %s188 = sphi 0, %s188
      %s190 = sphi 0, %s188
      %s191 = sphi 0, %s190
      %s205 = sphi 0, %s191
      %s209 = sphi 0, %s209
      %s211 = sphi 0, %s209
      %s212 = sphi 0, %s211
      %s226 = sphi 0, %s212
    $region4: #{tpu_custom_call.1} parent=1 // loop_header_branch
      %25 = sbr.rel (%p23) target = $region8
    $region5: #{tpu_custom_call.1} parent=1 // loop_body
      %s27 = ssub.s32 %s22, 1
      %s28 = ssub.s32 %s22, 2
      %s35 = sadd.s32 1, %s30
      %p36 = scmp.ge.s32.totalorder %s35, 1
      %s37 = scalar_select %p36, 0, %s35
      %s38 = sadd.s32 1, %s29
      %s39 = scalar_select %p36, %s38, %s29
      %p40 = scmp.ge.s32.totalorder %s39, 4
      %s41 = scalar_select %p40, 0, %s39
      %s42 = ssub.s32 %s29, %s41
      %p43 = scmp.eq.s32.totalorder %s42, 0
      %s45 = sadd.s32 %s44, 1
      %s46 = scalar_select %p43, %s44, %s45
      %p49 = pneg %p43
      %p50 = scmp.eq.s32.totalorder %s22, 3
      %p51 = por %p49, %p50
      %p52 = scmp.ne.s32.totalorder %s44, %s47
      %p53 = scmp.eq.s32.totalorder %s22, 0
      %p54 = por %p52, %p53
      %p55 = scmp.ne.s32.totalorder %s44, %s47
      %p56 = scmp.eq.s32.totalorder %s27, 3
      %p57 = por %p55, %p56
      %p58 = scmp.ne.s32.totalorder %s47, %s48
      %p59 = scmp.eq.s32.totalorder %s27, 0
      %p60 = por %p58, %p59
      %p61 = scmp.ne.s32.totalorder %s47, %s48
      %p62 = scmp.eq.s32.totalorder %s28, 3
      %p63 = por %p61, %p62
      %p65 = scmp.ne.s32.totalorder %s48, %s64
      %p66 = scmp.eq.s32.totalorder %s28, 0
      %p67 = por %p65, %p66
      %s68 = ssub.s32 %s29, %s41
      %p69 = scmp.eq.s32.totalorder %s68, 0
      %s71 = sadd.s32 %s70, 1
      %s72 = scalar_select %p69, %s70, %s71
      %p75 = pneg %p69
      %p76 = scmp.eq.s32.totalorder %s22, 3
      %p77 = por %p75, %p76
      %p78 = scmp.ne.s32.totalorder %s70, %s73
      %p79 = scmp.eq.s32.totalorder %s22, 0
      %p80 = por %p78, %p79
      %p81 = scmp.ne.s32.totalorder %s70, %s73
      %p82 = scmp.eq.s32.totalorder %s27, 3
      %p83 = por %p81, %p82
      %p84 = scmp.ne.s32.totalorder %s73, %s74
      %p85 = scmp.eq.s32.totalorder %s27, 0
      %p86 = por %p84, %p85
      %p87 = scmp.ne.s32.totalorder %s73, %s74
      %p88 = scmp.eq.s32.totalorder %s28, 3
      %p89 = por %p87, %p88
      %p91 = scmp.ne.s32.totalorder %s74, %s90
      %p92 = scmp.eq.s32.totalorder %s28, 0
      %p93 = por %p91, %p92
      %s94 = ssub.s32 %s29, %s41
      %p95 = scmp.eq.s32.totalorder %s94, 0
      %s97 = sadd.s32 %s96, 1
      %s98 = scalar_select %p95, %s96, %s97
      %p101 = pneg %p95
      %p102 = scmp.eq.s32.totalorder %s22, 3
      %p103 = por %p101, %p102
      %p104 = scmp.ne.s32.totalorder %s96, %s99
      %p105 = scmp.eq.s32.totalorder %s22, 0
      %p106 = por %p104, %p105
      %p107 = scmp.ne.s32.totalorder %s96, %s99
      %p108 = scmp.eq.s32.totalorder %s27, 3
      %p109 = por %p107, %p108
      %p110 = scmp.ne.s32.totalorder %s99, %s100
      %p111 = scmp.eq.s32.totalorder %s27, 0
      %p112 = por %p110, %p111
      %p113 = scmp.ne.s32.totalorder %s99, %s100
      %p114 = scmp.eq.s32.totalorder %s28, 3
      %p115 = por %p113, %p114
      %p117 = scmp.ne.s32.totalorder %s100, %s116
      %p118 = scmp.eq.s32.totalorder %s28, 0
      %p119 = por %p117, %p118
      %s120 = ssub.s32 %s29, %s41
      %p121 = scmp.eq.s32.totalorder %s120, 0
      %s123 = sadd.s32 %s122, 1
      %s124 = scalar_select %p121, %s122, %s123
      %p127 = pneg %p121
      %p128 = scmp.eq.s32.totalorder %s22, 3
      %p129 = por %p127, %p128
      %p130 = scmp.ne.s32.totalorder %s122, %s125
      %p131 = scmp.eq.s32.totalorder %s22, 0
      %p132 = por %p130, %p131
      %p133 = scmp.ne.s32.totalorder %s122, %s125
      %p134 = scmp.eq.s32.totalorder %s27, 3
      %p135 = por %p133, %p134
      %p136 = scmp.ne.s32.totalorder %s125, %s126
      %p137 = scmp.eq.s32.totalorder %s27, 0
      %p138 = por %p136, %p137
      %p139 = scmp.ne.s32.totalorder %s125, %s126
      %p140 = scmp.eq.s32.totalorder %s28, 3
      %p141 = por %p139, %p140
      %p143 = scmp.ne.s32.totalorder %s126, %s142
      %p144 = scmp.eq.s32.totalorder %s28, 0
      %p145 = por %p143, %p144
      %s147 = sadd.s32 %s146, 1
      %p150 = scmp.eq.s32.totalorder %s22, 3
      %p151 = scmp.ne.s32.totalorder %s146, %s148
      %p152 = scmp.eq.s32.totalorder %s22, 0
      %p153 = por %p151, %p152
      %p154 = scmp.ne.s32.totalorder %s146, %s148
      %p155 = scmp.eq.s32.totalorder %s27, 3
      %p156 = por %p154, %p155
      %p157 = scmp.ne.s32.totalorder %s148, %s149
      %p158 = scmp.eq.s32.totalorder %s27, 0
      %p159 = por %p157, %p158
      %p160 = scmp.ne.s32.totalorder %s148, %s149
      %p161 = scmp.eq.s32.totalorder %s28, 3
      %p162 = por %p160, %p161
      %p164 = scmp.ne.s32.totalorder %s149, %s163
      %p165 = scmp.eq.s32.totalorder %s28, 0
      %p166 = por %p164, %p165
      %s168 = sadd.s32 %s167, 1
      %p171 = scmp.eq.s32.totalorder %s22, 3
      %p172 = scmp.ne.s32.totalorder %s167, %s169
      %p173 = scmp.eq.s32.totalorder %s22, 0
      %p174 = por %p172, %p173
      %p175 = scmp.ne.s32.totalorder %s167, %s169
      %p176 = scmp.eq.s32.totalorder %s27, 3
      %p177 = por %p175, %p176
      %p178 = scmp.ne.s32.totalorder %s169, %s170
      %p179 = scmp.eq.s32.totalorder %s27, 0
      %p180 = por %p178, %p179
      %p181 = scmp.ne.s32.totalorder %s169, %s170
      %p182 = scmp.eq.s32.totalorder %s28, 3
      %p183 = por %p181, %p182
      %p185 = scmp.ne.s32.totalorder %s170, %s184
      %p186 = scmp.eq.s32.totalorder %s28, 0
      %p187 = por %p185, %p186
      %s189 = sadd.s32 %s188, 1
      %p192 = scmp.eq.s32.totalorder %s22, 3
      %p193 = scmp.ne.s32.totalorder %s188, %s190
      %p194 = scmp.eq.s32.totalorder %s22, 0
      %p195 = por %p193, %p194
      %p196 = scmp.ne.s32.totalorder %s188, %s190
      %p197 = scmp.eq.s32.totalorder %s27, 3
      %p198 = por %p196, %p197
      %p199 = scmp.ne.s32.totalorder %s190, %s191
      %p200 = scmp.eq.s32.totalorder %s27, 0
      %p201 = por %p199, %p200
      %p202 = scmp.ne.s32.totalorder %s190, %s191
      %p203 = scmp.eq.s32.totalorder %s28, 3
      %p204 = por %p202, %p203
      %p206 = scmp.ne.s32.totalorder %s191, %s205
      %p207 = scmp.eq.s32.totalorder %s28, 0
      %p208 = por %p206, %p207
      %s210 = sadd.s32 %s209, 1
      %p213 = scmp.eq.s32.totalorder %s22, 3
      %p214 = scmp.ne.s32.totalorder %s209, %s211
      %p215 = scmp.eq.s32.totalorder %s22, 0
      %p216 = por %p214, %p215
      %p217 = scmp.ne.s32.totalorder %s209, %s211
      %p218 = scmp.eq.s32.totalorder %s27, 3
      %p219 = por %p217, %p218
      %p220 = scmp.ne.s32.totalorder %s211, %s212
      %p221 = scmp.eq.s32.totalorder %s27, 0
      %p222 = por %p220, %p221
      %p223 = scmp.ne.s32.totalorder %s211, %s212
      %p224 = scmp.eq.s32.totalorder %s28, 3
      %p225 = por %p223, %p224
      %p227 = scmp.ne.s32.totalorder %s212, %s226
      %p228 = scmp.eq.s32.totalorder %s28, 0
      %p229 = por %p227, %p228
      %p230 = scmp.le.s32.totalorder 1, %s22
      %p231 = scmp.lt.s32.totalorder %s22, 5
      %p232 = pnand %p230, %p231
      %p233 = pneg %p232
      // Predicated region
      $region9: #{tpu_custom_call.1} parent=5 // pred_check
        _
      $region10: #{tpu_custom_call.1} parent=5 // pred_check_branch
        %235 = sbr.rel (%p232) target = $region12
      $region11: #{tpu_custom_call.1} parent=5 // pred_region
        %s236 = ssub.s32 %s22, 1
        // Predicated region
        $region13: #{tpu_custom_call.1} parent=11 // pred_check
          %p237 = pneg %p159
        $region14: #{tpu_custom_call.1} parent=11 // pred_check_branch
          %239 = sbr.rel (%p237) target = $region16
        $region15: #{tpu_custom_call.1} parent=11 // pred_region
          _
        $region16: #{tpu_custom_call.1} parent=11 // pred_fallthru
          _
        // Predicated region
        $region17: #{tpu_custom_call.1} parent=11 // pred_check
          %p240 = pneg %p180
        $region18: #{tpu_custom_call.1} parent=11 // pred_check_branch
          %242 = sbr.rel (%p240) target = $region20
        $region19: #{tpu_custom_call.1} parent=11 // pred_region
          _
        $region20: #{tpu_custom_call.1} parent=11 // pred_fallthru
          _
        // Predicated region
        $region21: #{tpu_custom_call.1} parent=11 // pred_check
          %p243 = pneg %p201
        $region22: #{tpu_custom_call.1} parent=11 // pred_check_branch
          %245 = sbr.rel (%p243) target = $region24
        $region23: #{tpu_custom_call.1} parent=11 // pred_region
          _
        $region24: #{tpu_custom_call.1} parent=11 // pred_fallthru
          _
      $region12: #{tpu_custom_call.1} parent=5 // pred_fallthru
        _
      %p246 = scmp.lt.s32.totalorder %s22, 4
      // Predicated region
      $region25: #{tpu_custom_call.1} parent=5 // pred_check
        %p247 = pneg %p246
      $region26: #{tpu_custom_call.1} parent=5 // pred_check_branch
        %249 = sbr.rel (%p247) target = $region28
      $region27: #{tpu_custom_call.1} parent=5 // pred_region
        // Predicated region
        $region29: #{tpu_custom_call.1} parent=27 // pred_check
          %p250 = pneg %p54
        $region30: #{tpu_custom_call.1} parent=27 // pred_check_branch
          %252 = sbr.rel (%p250) target = $region32
        $region31: #{tpu_custom_call.1} parent=27 // pred_region
          %s253 = sand.u32 %s44, 1
          %s254 = scalar_lea.sflag [#allocation7], %s253
          %s255 = sand.u32 %s44, 1
          %s256 = smul.addr %s255, 64
          %s257 = scalar_lea.vmem [#allocation6], %s256
          %s259 = ssub.s32 1024, 1024
          %260 = vsyncadd %s254, %s259
          %s261 = smul.addr %s29, 16
          %s262 = smul.addr %s261, 64
          %s263 = scalar_lea.hbm %s2, %s262
          %s264 = sshll.u32 %s257, 4
          %s265 = int_to_ptr.vmem [resolvable:$true] %s264
          %270 = dma.hbm_to_vmem [thread:$0]  %s263, 1024, %s265, %s254, 64, 64, 4
        $region32: #{tpu_custom_call.1} parent=27 // pred_fallthru
          _
        // Predicated region
        $region33: #{tpu_custom_call.1} parent=27 // pred_check
          %p271 = pneg %p80
        $region34: #{tpu_custom_call.1} parent=27 // pred_check_branch
          %273 = sbr.rel (%p271) target = $region36
        $region35: #{tpu_custom_call.1} parent=27 // pred_region
          %p274 = scmp.lt.s32.totalorder %s29, 3
          %s275 = scalar_select %p274, %s29, 3
          %s276 = scalar_lea.vmem %s3, %s275
        $region36: #{tpu_custom_call.1} parent=27 // pred_fallthru
          _
        // Predicated region
        $region37: #{tpu_custom_call.1} parent=27 // pred_check
          %p277 = pneg %p106
        $region38: #{tpu_custom_call.1} parent=27 // pred_check_branch
          %279 = sbr.rel (%p277) target = $region40
        $region39: #{tpu_custom_call.1} parent=27 // pred_region
          %s280 = sand.u32 %s96, 1
          %s281 = scalar_lea.sflag [#allocation10], %s280
          %s282 = sand.u32 %s96, 1
          %s283 = smul.addr %s282, 64
          %s284 = scalar_lea.vmem [#allocation9], %s283
          %s286 = ssub.s32 1024, 1024
          %287 = vsyncadd %s281, %s286
          %s288 = smul.addr %s29, 16
          %s289 = smul.addr %s288, 64
          %s290 = scalar_lea.hbm %s4, %s289
          %s291 = sshll.u32 %s284, 4
          %s292 = int_to_ptr.vmem [resolvable:$true] %s291
          %297 = dma.hbm_to_vmem [thread:$0]  %s290, 1024, %s292, %s281, 64, 64, 4
        $region40: #{tpu_custom_call.1} parent=27 // pred_fallthru
          _
        // Predicated region
        $region41: #{tpu_custom_call.1} parent=27 // pred_check
          %p298 = pneg %p132
        $region42: #{tpu_custom_call.1} parent=27 // pred_check_branch
          %300 = sbr.rel (%p298) target = $region44
        $region43: #{tpu_custom_call.1} parent=27 // pred_region
          %p301 = scmp.lt.s32.totalorder %s29, 3
          %s302 = scalar_select %p301, %s29, 3
          %s303 = scalar_lea.vmem %s5, %s302
        $region44: #{tpu_custom_call.1} parent=27 // pred_fallthru
          _
      $region28: #{tpu_custom_call.1} parent=5 // pred_fallthru
        _
      %p304 = scmp.le.s32.totalorder 1, %s22
      %p305 = scmp.lt.s32.totalorder %s22, 5
      %p306 = pnand %p304, %p305
      %p307 = pneg %p306
      // Predicated region
      $region45: #{tpu_custom_call.1} parent=5 // pred_check
        _
      $region46: #{tpu_custom_call.1} parent=5 // pred_check_branch
        %309 = sbr.rel (%p306) target = $region48
      $region47: #{tpu_custom_call.1} parent=5 // pred_region
        %s310 = ssub.s32 %s22, 1
        %s311 = sand.u32 %s47, 1
        %s312 = scalar_lea.sflag [#allocation7], %s311
        %s313 = sand.u32 %s47, 1
        %s314 = smul.addr %s313, 64
        %s315 = scalar_lea.vmem [#allocation6], %s314
        // Predicated region
        $region49: #{tpu_custom_call.1} parent=47 // pred_check
          %p316 = pneg %p60
        $region50: #{tpu_custom_call.1} parent=47 // pred_check_branch
          %318 = sbr.rel (%p316) target = $region52
        $region51: #{tpu_custom_call.1} parent=47 // pred_region
          %319 = dma.done %s312, 1024
        $region52: #{tpu_custom_call.1} parent=47 // pred_fallthru
          _
        %s320 = sand.u32 %s99, 1
        %s321 = scalar_lea.sflag [#allocation10], %s320
        %s322 = sand.u32 %s99, 1
        %s323 = smul.addr %s322, 64
        %s324 = scalar_lea.vmem [#allocation9], %s323
        // Predicated region
        $region53: #{tpu_custom_call.1} parent=47 // pred_check
          %p325 = pneg %p112
        $region54: #{tpu_custom_call.1} parent=47 // pred_check_branch
          %327 = sbr.rel (%p325) target = $region56
        $region55: #{tpu_custom_call.1} parent=47 // pred_region
          %328 = dma.done %s321, 1024
        $region56: #{tpu_custom_call.1} parent=47 // pred_fallthru
          _
        %s329 = sand.u32 %s47, 1
        %s330 = scalar_lea.sflag [#allocation7], %s329
        %s331 = sand.u32 %s47, 1
        %s332 = smul.addr %s331, 64
        %s333 = scalar_lea.vmem [#allocation6], %s332
        %p334 = pneg %p60
        %p335 = pneg %p57
        %p336 = scmp.lt.s32.totalorder %s31, 3
        %s337 = scalar_select %p336, %s31, 3
        %s338 = scalar_lea.vmem %s3, %s337
        %p339 = pneg %p86
        %p340 = pneg %p83
        %s341 = sand.u32 %s99, 1
        %s342 = scalar_lea.sflag [#allocation10], %s341
        %s343 = sand.u32 %s99, 1
        %s344 = smul.addr %s343, 64
        %s345 = scalar_lea.vmem [#allocation9], %s344
        %p346 = pneg %p112
        %p347 = pneg %p109
        %p348 = scmp.lt.s32.totalorder %s31, 3
        %s349 = scalar_select %p348, %s31, 3
        %s350 = scalar_lea.vmem %s5, %s349
        %p351 = pneg %p138
        %p352 = pneg %p135
        %p353 = pneg %p159
        %p354 = pneg %p156
        %p355 = pneg %p180
        %p356 = pneg %p177
        %p357 = pneg %p201
        %p358 = pneg %p198
        %p359 = pneg %p222
        %p360 = pneg %p219
        %p361 = scmp.lt.s32.totalorder %s31, 3
        %s362 = scalar_select %p361, %s31, 3
        %s363 = scalar_lea.vmem %s3, %s362
        %p364 = scmp.lt.s32.totalorder %s31, 3
        %s365 = scalar_select %p364, %s31, 3
        %s366 = scalar_lea.vmem %s5, %s365
        %p368 = scmp.eq.s32.totalorder %s32, 0
        %p369 = scmp.eq.s32.totalorder %s31, 0
        %p370 = pnand %p369, %p368
        %p371 = pneg %p370
        // Predicated region
        $region57: #{tpu_custom_call.1} parent=47 // pred_check
          _
        $region58: #{tpu_custom_call.1} parent=47 // pred_check_branch
          %373 = sbr.rel (%p370) target = $region60
        $region59: #{tpu_custom_call.1} parent=47 // pred_region
          // Predicated region
          $region61: #{tpu_custom_call.1} parent=59 // pred_check
            _
          $region62: #{tpu_custom_call.1} parent=59 // pred_check_branch
            %375 = sbr.rel target = $region64
          $region63: #{tpu_custom_call.1} parent=59 // pred_region
            %376 = sst [smem:[#allocation14]] [#allocation13]
            %377 = sst [smem:[#allocation15]] [#allocation12]
          $region64: #{tpu_custom_call.1} parent=59 // pred_fallthru
            _
          %379 = shalt.err (0)
          %s381 = sshll.u32 [#allocation2], 4
          %s382 = int_to_ptr.vmem [resolvable:$true] %s381
          %384 = dma.hbm_to_vmem [thread:$0]  %s0, 256, %s382, [#allocation5]
          %s385 = scalar_lea.sflag [#allocation5], 1
          %p387 = scmp.lt.u32.totalorder 128, 8
          %p388 = pneg %p387
          // Predicated region
          $region65: #{tpu_custom_call.1} parent=59 // pred_check
            _
          $region66: #{tpu_custom_call.1} parent=59 // pred_check_branch
            %390 = sbr.rel (%p387) target = $region68
          $region67: #{tpu_custom_call.1} parent=59 // pred_region
            %s406 = sand.u32 128, 7
            %p407 = scmp.eq.s32.totalorder %s406, 0
            // Predicated region
            $region80: #{tpu_custom_call.1} parent=67 // pred_check
              %p408 = pneg %p407
            $region81: #{tpu_custom_call.1} parent=67 // pred_check_branch
              %410 = sbr.rel (%p408) target = $region83
            $region82: #{tpu_custom_call.1} parent=67 // pred_region
              loop: start=0, step=1, limit=1
              $region84: #{tpu_custom_call.1} parent=82 // loop_pre_header
                _
              $region85: #{tpu_custom_call.1} parent=82 // loop_header
                %s412 = sphi 0, %s416
                %p413 = scmp.ge.s32.totalorder %s412, 1
                %s417 = sphi %s1, %s1
                %s418 = sphi [#allocation4], [#allocation4]
              $region86: #{tpu_custom_call.1} parent=82 // loop_header_branch
                %415 = sbr.rel (%p413) target = $region90
              $region87: #{tpu_custom_call.1} parent=82 // loop_body
                %v419 = vld [vmem:[%s417] sm:$0xff]
                %420 = vst [vmem:[%s418] sm:$0xff] %v419
                %v421 = vld [vmem:[%s417 + $0x8] sm:$0xff]
                %422 = vst [vmem:[%s418 + $0x8] sm:$0xff] %v421
                %v423 = vld [vmem:[%s417 + $0x10] sm:$0xff]
                %424 = vst [vmem:[%s418 + $0x10] sm:$0xff] %v423
                %v425 = vld [vmem:[%s417 + $0x18] sm:$0xff]
                %426 = vst [vmem:[%s418 + $0x18] sm:$0xff] %v425
                %v427 = vld [vmem:[%s417 + $0x20] sm:$0xff]
                %428 = vst [vmem:[%s418 + $0x20] sm:$0xff] %v427
                %v429 = vld [vmem:[%s417 + $0x28] sm:$0xff]
                %430 = vst [vmem:[%s418 + $0x28] sm:$0xff] %v429
                %v431 = vld [vmem:[%s417 + $0x30] sm:$0xff]
                %432 = vst [vmem:[%s418 + $0x30] sm:$0xff] %v431
                %v433 = vld [vmem:[%s417 + $0x38] sm:$0xff]
                %434 = vst [vmem:[%s418 + $0x38] sm:$0xff] %v433
                %v435 = vld [vmem:[%s417 + $0x40] sm:$0xff]
                %436 = vst [vmem:[%s418 + $0x40] sm:$0xff] %v435
                %v437 = vld [vmem:[%s417 + $0x48] sm:$0xff]
                %438 = vst [vmem:[%s418 + $0x48] sm:$0xff] %v437
                %v439 = vld [vmem:[%s417 + $0x50] sm:$0xff]
                %440 = vst [vmem:[%s418 + $0x50] sm:$0xff] %v439
                %v441 = vld [vmem:[%s417 + $0x58] sm:$0xff]
                %442 = vst [vmem:[%s418 + $0x58] sm:$0xff] %v441
                %v443 = vld [vmem:[%s417 + $0x60] sm:$0xff]
                %444 = vst [vmem:[%s418 + $0x60] sm:$0xff] %v443
                %v445 = vld [vmem:[%s417 + $0x68] sm:$0xff]
                %446 = vst [vmem:[%s418 + $0x68] sm:$0xff] %v445
                %v447 = vld [vmem:[%s417 + $0x70] sm:$0xff]
                %448 = vst [vmem:[%s418 + $0x70] sm:$0xff] %v447
                %v449 = vld [vmem:[%s417 + $0x78] sm:$0xff]
                %450 = vst [vmem:[%s418 + $0x78] sm:$0xff] %v449
              $region88: #{tpu_custom_call.1} parent=82 // loop_footer
                %s416 = sadd.s32 1, %s412
              $region89: #{tpu_custom_call.1} parent=82 // loop_footer_branch
                %411 = sbr.rel target = $region85
              $region90: #{tpu_custom_call.1} parent=82 // loop_exit
                _
            $region83: #{tpu_custom_call.1} parent=67 // pred_fallthru
              _
            %p451 = pneg %p407
            // Predicated region
            $region91: #{tpu_custom_call.1} parent=67 // pred_check
              _
            $region92: #{tpu_custom_call.1} parent=67 // pred_check_branch
              %453 = sbr.rel (%p407) target = $region94
            $region93: #{tpu_custom_call.1} parent=67 // pred_region
              %s454 = sand.u32 128, 7
            $region94: #{tpu_custom_call.1} parent=67 // pred_fallthru
              _
          $region68: #{tpu_custom_call.1} parent=59 // pred_fallthru
            _
          // Predicated region
          $region69: #{tpu_custom_call.1} parent=59 // pred_check
            %p391 = pneg %p387
          $region70: #{tpu_custom_call.1} parent=59 // pred_check_branch
            %393 = sbr.rel (%p391) target = $region72
          $region71: #{tpu_custom_call.1} parent=59 // pred_region
            %s394 = sshll.u32 1, 128
            %s395 = ssub.s32 %s394, 1
            loop: start=0, step=1, limit=1
            $region73: #{tpu_custom_call.1} parent=71 // loop_pre_header
              _
            $region74: #{tpu_custom_call.1} parent=71 // loop_header
              %s397 = sphi 0, %s401
              %p398 = scmp.ge.s32.totalorder %s397, 1
              %s402 = sphi %s1, %s1
              %s403 = sphi [#allocation4], [#allocation4]
            $region75: #{tpu_custom_call.1} parent=71 // loop_header_branch
              %400 = sbr.rel (%p398) target = $region79
            $region76: #{tpu_custom_call.1} parent=71 // loop_body
              %v404 = vld [vmem:[%s402] sm:%s395]
              %405 = vst [vmem:[%s403] sm:%s395] %v404
            $region77: #{tpu_custom_call.1} parent=71 // loop_footer
              %s401 = sadd.s32 1, %s397
            $region78: #{tpu_custom_call.1} parent=71 // loop_footer_branch
              %396 = sbr.rel target = $region74
            $region79: #{tpu_custom_call.1} parent=71 // loop_exit
              _
          $region72: #{tpu_custom_call.1} parent=59 // pred_fallthru
            _
          // Predicated region
          $region95: #{tpu_custom_call.1} parent=59 // pred_check
            _
          $region96: #{tpu_custom_call.1} parent=59 // pred_check_branch
            %457 = sbr.rel (0) target = $region98
          $region97: #{tpu_custom_call.1} parent=59 // pred_region
            %458 = vsyncadd %s385, 2048
          $region98: #{tpu_custom_call.1} parent=59 // pred_fallthru
            _
          %s459 = smul.u32 4, 16
          %s460 = smul.u32 %s459, 2
          %s461 = smul.u32 %s460, 1
          %s462 = sshll.u32 %s461, 4
          %463 = dma.done %s385, %s462
          %s464 = smul.u32 16, 1
          %s465 = sshll.u32 %s464, 4
          %466 = dma.done [#allocation5], %s465
        $region60: #{tpu_custom_call.1} parent=47 // pred_fallthru
          _
        %s467 = smul.u32 %s32, 16
        %p468 = scmp.lt.s32.totalorder %s31, 0
        %s469 = ssub.s32 0, %s31
        %s470 = scalar_select %p468, %s469, %s31
        %s471 = sand.u32 %s470, 1
        %s472 = ssub.s32 0, %s471
        %s473 = scalar_select %p468, %s472, %s471
        %p474 = scmp.ne.s32.totalorder %s473, 0
        %p475 = scmp.lt.s32.totalorder %s473, 0
        %p476 = pnand %p475, %p474
        %p477 = pneg %p476
        %s478 = sadd.s32 %s473, 2
        %s479 = scalar_select %p477, %s478, %s473
        %p480 = scmp.eq.s32.totalorder %s479, 0
        // Predicated region
        $region99: #{tpu_custom_call.1} parent=47 // pred_check
          %p481 = pneg %p480
        $region100: #{tpu_custom_call.1} parent=47 // pred_check_branch
          %483 = sbr.rel (%p481) target = $region102
        $region101: #{tpu_custom_call.1} parent=47 // pred_region
          %s484 = scalar_lea.vmem [#allocation2], %s467
          %v485 = vld [vmem:[%s484] sm:$0xff]
          %v486 = vld [vmem:[%s484 + $0x8] sm:$0xff]
          %v487 = vld [vmem:[#allocation2] sm:$0xff]
          %v488 = vld [vmem:[#allocation2 + $0x8] sm:$0xff]
          %v489 = vpack.c.bf16 %v488, %v487
          %s490 = smul.u32 %s467, 2
          %s491 = sadd.s32 0, %s490
          %s492 = smul.addr %s491, 4
          %s493 = scalar_lea.vmem [#allocation4], %s492
          %v494 = vld [vmem:[%s493] sm:$0xf]
          %v495 = vld [vmem:[%s493 + $0x4] sm:$0xf]
          %v496 = vld [vmem:[%s493 + $0x8] sm:$0xf]
          %v497 = vld [vmem:[%s493 + $0xc] sm:$0xf]
          %v498 = vld [vmem:[%s493 + $0x10] sm:$0xf]
          %v499 = vld [vmem:[%s493 + $0x14] sm:$0xf]
          %v500 = vld [vmem:[%s493 + $0x18] sm:$0xf]
          %v501 = vld [vmem:[%s493 + $0x1c] sm:$0xf]
          %v502 = vld [vmem:[%s493 + $0x20] sm:$0xf]
          %v503 = vld [vmem:[%s493 + $0x24] sm:$0xf]
          %v504 = vld [vmem:[%s493 + $0x28] sm:$0xf]
          %v505 = vld [vmem:[%s493 + $0x2c] sm:$0xf]
          %v506 = vld [vmem:[%s493 + $0x30] sm:$0xf]
          %v507 = vld [vmem:[%s493 + $0x34] sm:$0xf]
          %v508 = vld [vmem:[%s493 + $0x38] sm:$0xf]
          %v509 = vld [vmem:[%s493 + $0x3c] sm:$0xf]
          %v510 = vld [vmem:[%s493 + $0x40] sm:$0xf]
          %v511 = vld [vmem:[%s493 + $0x44] sm:$0xf]
          %v512 = vld [vmem:[%s493 + $0x48] sm:$0xf]
          %v513 = vld [vmem:[%s493 + $0x4c] sm:$0xf]
          %v514 = vld [vmem:[%s493 + $0x50] sm:$0xf]
          %v515 = vld [vmem:[%s493 + $0x54] sm:$0xf]
          %v516 = vld [vmem:[%s493 + $0x58] sm:$0xf]
          %v517 = vld [vmem:[%s493 + $0x5c] sm:$0xf]
          %v518 = vld [vmem:[%s493 + $0x60] sm:$0xf]
          %v519 = vld [vmem:[%s493 + $0x64] sm:$0xf]
          %v520 = vld [vmem:[%s493 + $0x68] sm:$0xf]
          %v521 = vld [vmem:[%s493 + $0x6c] sm:$0xf]
          %v522 = vld [vmem:[%s493 + $0x70] sm:$0xf]
          %v523 = vld [vmem:[%s493 + $0x74] sm:$0xf]
          %v524 = vld [vmem:[%s493 + $0x78] sm:$0xf]
          %v525 = vld [vmem:[%s493 + $0x7c] sm:$0xf]
          %v527 = vunpack.c.l.b16 %v489
          %v528 = vunpack.c.h.b16 %v489
          %v529 = vpack.c.b16 %v527, %v527
          %v530 = vpack.c.b16 %v528, %v528
          %v533 = vadd.bf16 %v494, %v529
          %v534 = vadd.bf16 %v495, %v530
          %v535 = vadd.bf16 %v496, %v529
          %v536 = vadd.bf16 %v497, %v530
          %v537 = vadd.bf16 %v498, %v529
          %v538 = vadd.bf16 %v499, %v530
          %v539 = vadd.bf16 %v500, %v529
          %v540 = vadd.bf16 %v501, %v530
          %v541 = vadd.bf16 %v502, %v529
          %v542 = vadd.bf16 %v503, %v530
          %v543 = vadd.bf16 %v504, %v529
          %v544 = vadd.bf16 %v505, %v530
          %v545 = vadd.bf16 %v506, %v529
          %v546 = vadd.bf16 %v507, %v530
          %v547 = vadd.bf16 %v508, %v529
          %v548 = vadd.bf16 %v509, %v530
          %v549 = vadd.bf16 %v510, %v529
          %v550 = vadd.bf16 %v511, %v530
          %v551 = vadd.bf16 %v512, %v529
          %v552 = vadd.bf16 %v513, %v530
          %v553 = vadd.bf16 %v514, %v529
          %v554 = vadd.bf16 %v515, %v530
          %v555 = vadd.bf16 %v516, %v529
          %v556 = vadd.bf16 %v517, %v530
          %v557 = vadd.bf16 %v518, %v529
          %v558 = vadd.bf16 %v519, %v530
          %v559 = vadd.bf16 %v520, %v529
          %v560 = vadd.bf16 %v521, %v530
          %v561 = vadd.bf16 %v522, %v529
          %v562 = vadd.bf16 %v523, %v530
          %v563 = vadd.bf16 %v524, %v529
          %v564 = vadd.bf16 %v525, %v530
          %v565 = vmax.bf16 %v533, 0
          %v566 = vmax.bf16 %v534, 0
          %v567 = vmax.bf16 %v535, 0
          %v568 = vmax.bf16 %v536, 0
          %v569 = vmax.bf16 %v537, 0
          %v570 = vmax.bf16 %v538, 0
          %v571 = vmax.bf16 %v539, 0
          %v572 = vmax.bf16 %v540, 0
          %v573 = vmax.bf16 %v541, 0
          %v574 = vmax.bf16 %v542, 0
          %v575 = vmax.bf16 %v543, 0
          %v576 = vmax.bf16 %v544, 0
          %v577 = vmax.bf16 %v545, 0
          %v578 = vmax.bf16 %v546, 0
          %v579 = vmax.bf16 %v547, 0
          %v580 = vmax.bf16 %v548, 0
          %v581 = vmax.bf16 %v549, 0
          %v582 = vmax.bf16 %v550, 0
          %v583 = vmax.bf16 %v551, 0
          %v584 = vmax.bf16 %v552, 0
          %v585 = vmax.bf16 %v553, 0
          %v586 = vmax.bf16 %v554, 0
          %v587 = vmax.bf16 %v555, 0
          %v588 = vmax.bf16 %v556, 0
          %v589 = vmax.bf16 %v557, 0
          %v590 = vmax.bf16 %v558, 0
          %v591 = vmax.bf16 %v559, 0
          %v592 = vmax.bf16 %v560, 0
          %v593 = vmax.bf16 %v561, 0
          %v594 = vmax.bf16 %v562, 0
          %v595 = vmax.bf16 %v563, 0
          %v596 = vmax.bf16 %v564, 0
          %v597 = vunpack.c.l.bf16 %v565
          %v598 = vunpack.c.l.bf16 %v566
          %v599 = vunpack.c.l.bf16 %v567
          %v600 = vunpack.c.l.bf16 %v568
          %v601 = vunpack.c.l.bf16 %v569
          %v602 = vunpack.c.l.bf16 %v570
          %v603 = vunpack.c.l.bf16 %v571
          %v604 = vunpack.c.l.bf16 %v572
          %v605 = vunpack.c.l.bf16 %v573
          %v606 = vunpack.c.l.bf16 %v574
          %v607 = vunpack.c.l.bf16 %v575
          %v608 = vunpack.c.l.bf16 %v576
          %v609 = vunpack.c.l.bf16 %v577
          %v610 = vunpack.c.l.bf16 %v578
          %v611 = vunpack.c.l.bf16 %v579
          %v612 = vunpack.c.l.bf16 %v580
          %v613 = vunpack.c.l.bf16 %v581
          %v614 = vunpack.c.l.bf16 %v582
          %v615 = vunpack.c.l.bf16 %v583
          %v616 = vunpack.c.l.bf16 %v584
          %v617 = vunpack.c.l.bf16 %v585
          %v618 = vunpack.c.l.bf16 %v586
          %v619 = vunpack.c.l.bf16 %v587
          %v620 = vunpack.c.l.bf16 %v588
          %v621 = vunpack.c.l.bf16 %v589
          %v622 = vunpack.c.l.bf16 %v590
          %v623 = vunpack.c.l.bf16 %v591
          %v624 = vunpack.c.l.bf16 %v592
          %v625 = vunpack.c.l.bf16 %v593
          %v626 = vunpack.c.l.bf16 %v594
          %v627 = vunpack.c.l.bf16 %v595
          %v628 = vunpack.c.l.bf16 %v596
          %v629 = vadd.f32 %v597, %v598
          %v630 = vrot.slane %v629, 4
          %v631 = vadd.f32 %v629, %v630
          %v632 = vrot.slane %v631, 2
          %v633 = vadd.f32 %v631, %v632
          %v634 = vrot.slane %v633, 1
          %v635 = vadd.f32 %v633, %v634
          %v636 = vadd.f32 %v599, %v600
          %v637 = vrot.slane %v636, 4
          %v638 = vadd.f32 %v636, %v637
          %v639 = vrot.slane %v638, 2
          %v640 = vadd.f32 %v638, %v639
          %v641 = vrot.slane %v640, 1
          %v642 = vadd.f32 %v640, %v641
          %v643 = vadd.f32 %v601, %v602
          %v644 = vrot.slane %v643, 4
          %v645 = vadd.f32 %v643, %v644
          %v646 = vrot.slane %v645, 2
          %v647 = vadd.f32 %v645, %v646
          %v648 = vrot.slane %v647, 1
          %v649 = vadd.f32 %v647, %v648
          %v650 = vadd.f32 %v603, %v604
          %v651 = vrot.slane %v650, 4
          %v652 = vadd.f32 %v650, %v651
          %v653 = vrot.slane %v652, 2
          %v654 = vadd.f32 %v652, %v653
          %v655 = vrot.slane %v654, 1
          %v656 = vadd.f32 %v654, %v655
          %v657 = vadd.f32 %v605, %v606
          %v658 = vrot.slane %v657, 4
          %v659 = vadd.f32 %v657, %v658
          %v660 = vrot.slane %v659, 2
          %v661 = vadd.f32 %v659, %v660
          %v662 = vrot.slane %v661, 1
          %v663 = vadd.f32 %v661, %v662
          %v664 = vadd.f32 %v607, %v608
          %v665 = vrot.slane %v664, 4
          %v666 = vadd.f32 %v664, %v665
          %v667 = vrot.slane %v666, 2
          %v668 = vadd.f32 %v666, %v667
          %v669 = vrot.slane %v668, 1
          %v670 = vadd.f32 %v668, %v669
          %v671 = vadd.f32 %v609, %v610
          %v672 = vrot.slane %v671, 4
          %v673 = vadd.f32 %v671, %v672
          %v674 = vrot.slane %v673, 2
          %v675 = vadd.f32 %v673, %v674
          %v676 = vrot.slane %v675, 1
          %v677 = vadd.f32 %v675, %v676
          %v678 = vadd.f32 %v611, %v612
          %v679 = vrot.slane %v678, 4
          %v680 = vadd.f32 %v678, %v679
          %v681 = vrot.slane %v680, 2
          %v682 = vadd.f32 %v680, %v681
          %v683 = vrot.slane %v682, 1
          %v684 = vadd.f32 %v682, %v683
          %v685 = vadd.f32 %v613, %v614
          %v686 = vrot.slane %v685, 4
          %v687 = vadd.f32 %v685, %v686
          %v688 = vrot.slane %v687, 2
          %v689 = vadd.f32 %v687, %v688
          %v690 = vrot.slane %v689, 1
          %v691 = vadd.f32 %v689, %v690
          %v692 = vadd.f32 %v615, %v616
          %v693 = vrot.slane %v692, 4
          %v694 = vadd.f32 %v692, %v693
          %v695 = vrot.slane %v694, 2
          %v696 = vadd.f32 %v694, %v695
          %v697 = vrot.slane %v696, 1
          %v698 = vadd.f32 %v696, %v697
          %v699 = vadd.f32 %v617, %v618
          %v700 = vrot.slane %v699, 4
          %v701 = vadd.f32 %v699, %v700
          %v702 = vrot.slane %v701, 2
          %v703 = vadd.f32 %v701, %v702
          %v704 = vrot.slane %v703, 1
          %v705 = vadd.f32 %v703, %v704
          %v706 = vadd.f32 %v619, %v620
          %v707 = vrot.slane %v706, 4
          %v708 = vadd.f32 %v706, %v707
          %v709 = vrot.slane %v708, 2
          %v710 = vadd.f32 %v708, %v709
          %v711 = vrot.slane %v710, 1
          %v712 = vadd.f32 %v710, %v711
          %v713 = vadd.f32 %v621, %v622
          %v714 = vrot.slane %v713, 4
          %v715 = vadd.f32 %v713, %v714
          %v716 = vrot.slane %v715, 2
          %v717 = vadd.f32 %v715, %v716
          %v718 = vrot.slane %v717, 1
          %v719 = vadd.f32 %v717, %v718
          %v720 = vadd.f32 %v623, %v624
          %v721 = vrot.slane %v720, 4
          %v722 = vadd.f32 %v720, %v721
          %v723 = vrot.slane %v722, 2
          %v724 = vadd.f32 %v722, %v723
          %v725 = vrot.slane %v724, 1
          %v726 = vadd.f32 %v724, %v725
          %v727 = vadd.f32 %v625, %v626
          %v728 = vrot.slane %v727, 4
          %v729 = vadd.f32 %v727, %v728
          %v730 = vrot.slane %v729, 2
          %v731 = vadd.f32 %v729, %v730
          %v732 = vrot.slane %v731, 1
          %v733 = vadd.f32 %v731, %v732
          %v734 = vadd.f32 %v627, %v628
          %v735 = vrot.slane %v734, 4
          %v736 = vadd.f32 %v734, %v735
          %v737 = vrot.slane %v736, 2
          %v738 = vadd.f32 %v736, %v737
          %v739 = vrot.slane %v738, 1
          %v740 = vadd.f32 %v738, %v739
          %vm757 = vcmask 1041409
          %v758 = vsel %vm757, %v642, %v635
          %vm759 = vcmask 1042434
          %v760 = vsel %vm759, %v649, %v758
          %vm761 = vcmask 1043459
          %v762 = vsel %vm761, %v656, %v760
          %vm763 = vcmask 1044484
          %v764 = vsel %vm763, %v663, %v762
          %vm765 = vcmask 1045509
          %v766 = vsel %vm765, %v670, %v764
          %vm767 = vcmask 1046534
          %v768 = vsel %vm767, %v677, %v766
          %vm769 = vcmask 1047559
          %v770 = vsel %vm769, %v684, %v768
          %v771 = vsel %vm757, %v698, %v691
          %v772 = vsel %vm759, %v705, %v771
          %v773 = vsel %vm761, %v712, %v772
          %v774 = vsel %vm763, %v719, %v773
          %v775 = vsel %vm765, %v726, %v774
          %v776 = vsel %vm767, %v733, %v775
          %v777 = vsel %vm769, %v740, %v776
          %v780 = vadd.f32 %v485, %v770
          %v781 = vadd.f32 %v486, %v777
          %s782 = scalar_lea.vmem [#allocation3], %s467
          %783 = vst [vmem:[%s782] sm:$0xff] %v780
          %784 = vst [vmem:[%s782 + $0x8] sm:$0xff] %v781
        $region102: #{tpu_custom_call.1} parent=47 // pred_fallthru
          _
        %p785 = scmp.eq.s32.totalorder %s479, 1
        // Predicated region
        $region103: #{tpu_custom_call.1} parent=47 // pred_check
          %p786 = pneg %p785
        $region104: #{tpu_custom_call.1} parent=47 // pred_check_branch
          %788 = sbr.rel (%p786) target = $region106
        $region105: #{tpu_custom_call.1} parent=47 // pred_region
          %s789 = sadd.s32 %s467, 16
          %s790 = scalar_lea.vmem [#allocation2], %s789
          %v791 = vld [vmem:[%s790] sm:$0xff]
          %v792 = vld [vmem:[%s790 + $0x8] sm:$0xff]
          %s793 = sadd.s32 0, 16
          %s794 = scalar_lea.vmem [#allocation2], %s793
          %v795 = vld [vmem:[%s794] sm:$0xff]
          %v796 = vld [vmem:[%s794 + $0x8] sm:$0xff]
          %v797 = vpack.c.bf16 %v796, %v795
          %s798 = smul.u32 %s467, 2
          %s799 = sadd.s32 0, %s798
          %s800 = smul.addr %s799, 4
          %s801 = scalar_lea.vmem [#allocation4], %s800
          %v802 = vld [vmem:[%s801] sm:$0xf]
          %v803 = vld [vmem:[%s801 + $0x4] sm:$0xf]
          %v804 = vld [vmem:[%s801 + $0x8] sm:$0xf]
          %v805 = vld [vmem:[%s801 + $0xc] sm:$0xf]
          %v806 = vld [vmem:[%s801 + $0x10] sm:$0xf]
          %v807 = vld [vmem:[%s801 + $0x14] sm:$0xf]
          %v808 = vld [vmem:[%s801 + $0x18] sm:$0xf]
          %v809 = vld [vmem:[%s801 + $0x1c] sm:$0xf]
          %v810 = vld [vmem:[%s801 + $0x20] sm:$0xf]
          %v811 = vld [vmem:[%s801 + $0x24] sm:$0xf]
          %v812 = vld [vmem:[%s801 + $0x28] sm:$0xf]
          %v813 = vld [vmem:[%s801 + $0x2c] sm:$0xf]
          %v814 = vld [vmem:[%s801 + $0x30] sm:$0xf]
          %v815 = vld [vmem:[%s801 + $0x34] sm:$0xf]
          %v816 = vld [vmem:[%s801 + $0x38] sm:$0xf]
          %v817 = vld [vmem:[%s801 + $0x3c] sm:$0xf]
          %v818 = vld [vmem:[%s801 + $0x40] sm:$0xf]
          %v819 = vld [vmem:[%s801 + $0x44] sm:$0xf]
          %v820 = vld [vmem:[%s801 + $0x48] sm:$0xf]
          %v821 = vld [vmem:[%s801 + $0x4c] sm:$0xf]
          %v822 = vld [vmem:[%s801 + $0x50] sm:$0xf]
          %v823 = vld [vmem:[%s801 + $0x54] sm:$0xf]
          %v824 = vld [vmem:[%s801 + $0x58] sm:$0xf]
          %v825 = vld [vmem:[%s801 + $0x5c] sm:$0xf]
          %v826 = vld [vmem:[%s801 + $0x60] sm:$0xf]
          %v827 = vld [vmem:[%s801 + $0x64] sm:$0xf]
          %v828 = vld [vmem:[%s801 + $0x68] sm:$0xf]
          %v829 = vld [vmem:[%s801 + $0x6c] sm:$0xf]
          %v830 = vld [vmem:[%s801 + $0x70] sm:$0xf]
          %v831 = vld [vmem:[%s801 + $0x74] sm:$0xf]
          %v832 = vld [vmem:[%s801 + $0x78] sm:$0xf]
          %v833 = vld [vmem:[%s801 + $0x7c] sm:$0xf]
          %v835 = vunpack.c.l.b16 %v797
          %v836 = vunpack.c.h.b16 %v797
          %v837 = vpack.c.b16 %v835, %v835
          %v838 = vpack.c.b16 %v836, %v836
          %v841 = vadd.bf16 %v802, %v837
          %v842 = vadd.bf16 %v803, %v838
          %v843 = vadd.bf16 %v804, %v837
          %v844 = vadd.bf16 %v805, %v838
          %v845 = vadd.bf16 %v806, %v837
          %v846 = vadd.bf16 %v807, %v838
          %v847 = vadd.bf16 %v808, %v837
          %v848 = vadd.bf16 %v809, %v838
          %v849 = vadd.bf16 %v810, %v837
          %v850 = vadd.bf16 %v811, %v838
          %v851 = vadd.bf16 %v812, %v837
          %v852 = vadd.bf16 %v813, %v838
          %v853 = vadd.bf16 %v814, %v837
          %v854 = vadd.bf16 %v815, %v838
          %v855 = vadd.bf16 %v816, %v837
          %v856 = vadd.bf16 %v817, %v838
          %v857 = vadd.bf16 %v818, %v837
          %v858 = vadd.bf16 %v819, %v838
          %v859 = vadd.bf16 %v820, %v837
          %v860 = vadd.bf16 %v821, %v838
          %v861 = vadd.bf16 %v822, %v837
          %v862 = vadd.bf16 %v823, %v838
          %v863 = vadd.bf16 %v824, %v837
          %v864 = vadd.bf16 %v825, %v838
          %v865 = vadd.bf16 %v826, %v837
          %v866 = vadd.bf16 %v827, %v838
          %v867 = vadd.bf16 %v828, %v837
          %v868 = vadd.bf16 %v829, %v838
          %v869 = vadd.bf16 %v830, %v837
          %v870 = vadd.bf16 %v831, %v838
          %v871 = vadd.bf16 %v832, %v837
          %v872 = vadd.bf16 %v833, %v838
          %v873 = vmax.bf16 %v841, 0
          %v874 = vmax.bf16 %v842, 0
          %v875 = vmax.bf16 %v843, 0
          %v876 = vmax.bf16 %v844, 0
          %v877 = vmax.bf16 %v845, 0
          %v878 = vmax.bf16 %v846, 0
          %v879 = vmax.bf16 %v847, 0
          %v880 = vmax.bf16 %v848, 0
          %v881 = vmax.bf16 %v849, 0
          %v882 = vmax.bf16 %v850, 0
          %v883 = vmax.bf16 %v851, 0
          %v884 = vmax.bf16 %v852, 0
          %v885 = vmax.bf16 %v853, 0
          %v886 = vmax.bf16 %v854, 0
          %v887 = vmax.bf16 %v855, 0
          %v888 = vmax.bf16 %v856, 0
          %v889 = vmax.bf16 %v857, 0
          %v890 = vmax.bf16 %v858, 0
          %v891 = vmax.bf16 %v859, 0
          %v892 = vmax.bf16 %v860, 0
          %v893 = vmax.bf16 %v861, 0
          %v894 = vmax.bf16 %v862, 0
          %v895 = vmax.bf16 %v863, 0
          %v896 = vmax.bf16 %v864, 0
          %v897 = vmax.bf16 %v865, 0
          %v898 = vmax.bf16 %v866, 0
          %v899 = vmax.bf16 %v867, 0
          %v900 = vmax.bf16 %v868, 0
          %v901 = vmax.bf16 %v869, 0
          %v902 = vmax.bf16 %v870, 0
          %v903 = vmax.bf16 %v871, 0
          %v904 = vmax.bf16 %v872, 0
          %v905 = vunpack.c.l.bf16 %v873
          %v906 = vunpack.c.l.bf16 %v874
          %v907 = vunpack.c.l.bf16 %v875
          %v908 = vunpack.c.l.bf16 %v876
          %v909 = vunpack.c.l.bf16 %v877
          %v910 = vunpack.c.l.bf16 %v878
          %v911 = vunpack.c.l.bf16 %v879
          %v912 = vunpack.c.l.bf16 %v880
          %v913 = vunpack.c.l.bf16 %v881
          %v914 = vunpack.c.l.bf16 %v882
          %v915 = vunpack.c.l.bf16 %v883
          %v916 = vunpack.c.l.bf16 %v884
          %v917 = vunpack.c.l.bf16 %v885
          %v918 = vunpack.c.l.bf16 %v886
          %v919 = vunpack.c.l.bf16 %v887
          %v920 = vunpack.c.l.bf16 %v888
          %v921 = vunpack.c.l.bf16 %v889
          %v922 = vunpack.c.l.bf16 %v890
          %v923 = vunpack.c.l.bf16 %v891
          %v924 = vunpack.c.l.bf16 %v892
          %v925 = vunpack.c.l.bf16 %v893
          %v926 = vunpack.c.l.bf16 %v894
          %v927 = vunpack.c.l.bf16 %v895
          %v928 = vunpack.c.l.bf16 %v896
          %v929 = vunpack.c.l.bf16 %v897
          %v930 = vunpack.c.l.bf16 %v898
          %v931 = vunpack.c.l.bf16 %v899
          %v932 = vunpack.c.l.bf16 %v900
          %v933 = vunpack.c.l.bf16 %v901
          %v934 = vunpack.c.l.bf16 %v902
          %v935 = vunpack.c.l.bf16 %v903
          %v936 = vunpack.c.l.bf16 %v904
          %v937 = vadd.f32 %v905, %v906
          %v938 = vrot.slane %v937, 4
          %v939 = vadd.f32 %v937, %v938
          %v940 = vrot.slane %v939, 2
          %v941 = vadd.f32 %v939, %v940
          %v942 = vrot.slane %v941, 1
          %v943 = vadd.f32 %v941, %v942
          %v944 = vadd.f32 %v907, %v908
          %v945 = vrot.slane %v944, 4
          %v946 = vadd.f32 %v944, %v945
          %v947 = vrot.slane %v946, 2
          %v948 = vadd.f32 %v946, %v947
          %v949 = vrot.slane %v948, 1
          %v950 = vadd.f32 %v948, %v949
          %v951 = vadd.f32 %v909, %v910
          %v952 = vrot.slane %v951, 4
          %v953 = vadd.f32 %v951, %v952
          %v954 = vrot.slane %v953, 2
          %v955 = vadd.f32 %v953, %v954
          %v956 = vrot.slane %v955, 1
          %v957 = vadd.f32 %v955, %v956
          %v958 = vadd.f32 %v911, %v912
          %v959 = vrot.slane %v958, 4
          %v960 = vadd.f32 %v958, %v959
          %v961 = vrot.slane %v960, 2
          %v962 = vadd.f32 %v960, %v961
          %v963 = vrot.slane %v962, 1
          %v964 = vadd.f32 %v962, %v963
          %v965 = vadd.f32 %v913, %v914
          %v966 = vrot.slane %v965, 4
          %v967 = vadd.f32 %v965, %v966
          %v968 = vrot.slane %v967, 2
          %v969 = vadd.f32 %v967, %v968
          %v970 = vrot.slane %v969, 1
          %v971 = vadd.f32 %v969, %v970
          %v972 = vadd.f32 %v915, %v916
          %v973 = vrot.slane %v972, 4
          %v974 = vadd.f32 %v972, %v973
          %v975 = vrot.slane %v974, 2
          %v976 = vadd.f32 %v974, %v975
          %v977 = vrot.slane %v976, 1
          %v978 = vadd.f32 %v976, %v977
          %v979 = vadd.f32 %v917, %v918
          %v980 = vrot.slane %v979, 4
          %v981 = vadd.f32 %v979, %v980
          %v982 = vrot.slane %v981, 2
          %v983 = vadd.f32 %v981, %v982
          %v984 = vrot.slane %v983, 1
          %v985 = vadd.f32 %v983, %v984
          %v986 = vadd.f32 %v919, %v920
          %v987 = vrot.slane %v986, 4
          %v988 = vadd.f32 %v986, %v987
          %v989 = vrot.slane %v988, 2
          %v990 = vadd.f32 %v988, %v989
          %v991 = vrot.slane %v990, 1
          %v992 = vadd.f32 %v990, %v991
          %v993 = vadd.f32 %v921, %v922
          %v994 = vrot.slane %v993, 4
          %v995 = vadd.f32 %v993, %v994
          %v996 = vrot.slane %v995, 2
          %v997 = vadd.f32 %v995, %v996
          %v998 = vrot.slane %v997, 1
          %v999 = vadd.f32 %v997, %v998
          %v1000 = vadd.f32 %v923, %v924
          %v1001 = vrot.slane %v1000, 4
          %v1002 = vadd.f32 %v1000, %v1001
          %v1003 = vrot.slane %v1002, 2
          %v1004 = vadd.f32 %v1002, %v1003
          %v1005 = vrot.slane %v1004, 1
          %v1006 = vadd.f32 %v1004, %v1005
          %v1007 = vadd.f32 %v925, %v926
          %v1008 = vrot.slane %v1007, 4
          %v1009 = vadd.f32 %v1007, %v1008
          %v1010 = vrot.slane %v1009, 2
          %v1011 = vadd.f32 %v1009, %v1010
          %v1012 = vrot.slane %v1011, 1
          %v1013 = vadd.f32 %v1011, %v1012
          %v1014 = vadd.f32 %v927, %v928
          %v1015 = vrot.slane %v1014, 4
          %v1016 = vadd.f32 %v1014, %v1015
          %v1017 = vrot.slane %v1016, 2
          %v1018 = vadd.f32 %v1016, %v1017
          %v1019 = vrot.slane %v1018, 1
          %v1020 = vadd.f32 %v1018, %v1019
          %v1021 = vadd.f32 %v929, %v930
          %v1022 = vrot.slane %v1021, 4
          %v1023 = vadd.f32 %v1021, %v1022
          %v1024 = vrot.slane %v1023, 2
          %v1025 = vadd.f32 %v1023, %v1024
          %v1026 = vrot.slane %v1025, 1
          %v1027 = vadd.f32 %v1025, %v1026
          %v1028 = vadd.f32 %v931, %v932
          %v1029 = vrot.slane %v1028, 4
          %v1030 = vadd.f32 %v1028, %v1029
          %v1031 = vrot.slane %v1030, 2
          %v1032 = vadd.f32 %v1030, %v1031
          %v1033 = vrot.slane %v1032, 1
          %v1034 = vadd.f32 %v1032, %v1033
          %v1035 = vadd.f32 %v933, %v934
          %v1036 = vrot.slane %v1035, 4
          %v1037 = vadd.f32 %v1035, %v1036
          %v1038 = vrot.slane %v1037, 2
          %v1039 = vadd.f32 %v1037, %v1038
          %v1040 = vrot.slane %v1039, 1
          %v1041 = vadd.f32 %v1039, %v1040
          %v1042 = vadd.f32 %v935, %v936
          %v1043 = vrot.slane %v1042, 4
          %v1044 = vadd.f32 %v1042, %v1043
          %v1045 = vrot.slane %v1044, 2
          %v1046 = vadd.f32 %v1044, %v1045
          %v1047 = vrot.slane %v1046, 1
          %v1048 = vadd.f32 %v1046, %v1047
          %vm1065 = vcmask 1041409
          %v1066 = vsel %vm1065, %v950, %v943
          %vm1067 = vcmask 1042434
          %v1068 = vsel %vm1067, %v957, %v1066
          %vm1069 = vcmask 1043459
          %v1070 = vsel %vm1069, %v964, %v1068
          %vm1071 = vcmask 1044484
          %v1072 = vsel %vm1071, %v971, %v1070
          %vm1073 = vcmask 1045509
          %v1074 = vsel %vm1073, %v978, %v1072
          %vm1075 = vcmask 1046534
          %v1076 = vsel %vm1075, %v985, %v1074
          %vm1077 = vcmask 1047559
          %v1078 = vsel %vm1077, %v992, %v1076
          %v1079 = vsel %vm1065, %v1006, %v999
          %v1080 = vsel %vm1067, %v1013, %v1079
          %v1081 = vsel %vm1069, %v1020, %v1080
          %v1082 = vsel %vm1071, %v1027, %v1081
          %v1083 = vsel %vm1073, %v1034, %v1082
          %v1084 = vsel %vm1075, %v1041, %v1083
          %v1085 = vsel %vm1077, %v1048, %v1084
          %v1088 = vadd.f32 %v791, %v1078
          %v1089 = vadd.f32 %v792, %v1085
          %s1090 = scalar_lea.vmem [#allocation3], %s467
          %1091 = vst [vmem:[%s1090] sm:$0xff] %v1088
          %1092 = vst [vmem:[%s1090 + $0x8] sm:$0xff] %v1089
        $region106: #{tpu_custom_call.1} parent=47 // pred_fallthru
          _
        %p1093 = pnand %p368, %p480
        %p1094 = pneg %p1093
        // Predicated region
        $region107: #{tpu_custom_call.1} parent=47 // pred_check
          _
        $region108: #{tpu_custom_call.1} parent=47 // pred_check_branch
          %1096 = sbr.rel (%p1093) target = $region110
        $region109: #{tpu_custom_call.1} parent=47 // pred_region
          %v1097 = vld [vmem:[#allocation3] sm:$0xff]
          %v1098 = vld [vmem:[#allocation3 + $0x8] sm:$0xff]
          %v1099 = vpack.c.bf16 %v1098, %v1097
          %v1100 = vld [vmem:[%s315] sm:$0xf]
          %v1101 = vld [vmem:[%s315 + $0x4] sm:$0xf]
          %v1102 = vld [vmem:[%s315 + $0x8] sm:$0xf]
          %v1103 = vld [vmem:[%s315 + $0xc] sm:$0xf]
          %v1104 = vld [vmem:[%s315 + $0x10] sm:$0xf]
          %v1105 = vld [vmem:[%s315 + $0x14] sm:$0xf]
          %v1106 = vld [vmem:[%s315 + $0x18] sm:$0xf]
          %v1107 = vld [vmem:[%s315 + $0x1c] sm:$0xf]
          %v1108 = vld [vmem:[%s315 + $0x20] sm:$0xf]
          %v1109 = vld [vmem:[%s315 + $0x24] sm:$0xf]
          %v1110 = vld [vmem:[%s315 + $0x28] sm:$0xf]
          %v1111 = vld [vmem:[%s315 + $0x2c] sm:$0xf]
          %v1112 = vld [vmem:[%s315 + $0x30] sm:$0xf]
          %v1113 = vld [vmem:[%s315 + $0x34] sm:$0xf]
          %v1114 = vld [vmem:[%s315 + $0x38] sm:$0xf]
          %v1115 = vld [vmem:[%s315 + $0x3c] sm:$0xf]
          %v1116 = vld [vmem:[%s363] sm:$0x1]
          %v1118 = vlaneseq
          %v1119 = vshrl.u32 %v1118, 7
          %v1120 = vsub.s32 0, %v1119
          %v1121 = vrot.slane %v1116, %v1120
          %v1139 = vunpack.c.l.b16 %v1100
          %v1140 = vunpack.c.l.b16 %v1101
          %v1141 = vunpack.c.l.b16 %v1102
          %v1142 = vunpack.c.l.b16 %v1103
          %v1143 = vunpack.c.l.b16 %v1104
          %v1144 = vunpack.c.l.b16 %v1105
          %v1145 = vunpack.c.l.b16 %v1106
          %v1146 = vunpack.c.l.b16 %v1107
          %v1147 = vunpack.c.l.b16 %v1108
          %v1148 = vunpack.c.l.b16 %v1109
          %v1149 = vunpack.c.l.b16 %v1110
          %v1150 = vunpack.c.l.b16 %v1111
          %v1151 = vunpack.c.l.b16 %v1112
          %v1152 = vunpack.c.l.b16 %v1113
          %v1153 = vunpack.c.l.b16 %v1114
          %v1154 = vunpack.c.l.b16 %v1115
          %v1155 = vpack.c.b16 %v1140, %v1139
          %v1156 = vpack.c.b16 %v1142, %v1141
          %v1157 = vpack.c.b16 %v1144, %v1143
          %v1158 = vpack.c.b16 %v1146, %v1145
          %v1159 = vpack.c.b16 %v1148, %v1147
          %v1160 = vpack.c.b16 %v1150, %v1149
          %v1161 = vpack.c.b16 %v1152, %v1151
          %v1162 = vpack.c.b16 %v1154, %v1153
          %1171 = vmatprep.subr.bf16.mxu0 0
          %1172 = vmatpush1.bf16.msra.mxu0 %v1162
          %1173 = vmatprep.subr.bf16.mxu0 0
          %1174 = vmatpush1.bf16.msra.mxu0 %v1161
          %1175 = vmatprep.subr.bf16.mxu0 0
          %1176 = vmatpush1.bf16.msra.mxu0 %v1160
          %1177 = vmatprep.subr.bf16.mxu0 0
          %1178 = vmatpush1.bf16.msra.mxu0 %v1159
          %1179 = vmatprep.subr.bf16.mxu0 0
          %1180 = vmatpush1.bf16.msra.mxu0 %v1158
          %1181 = vmatprep.subr.bf16.mxu0 0
          %1182 = vmatpush1.bf16.msra.mxu0 %v1157
          %1183 = vmatprep.subr.bf16.mxu0 0
          %1184 = vmatpush1.bf16.msra.mxu0 %v1156
          %1185 = vmatprep.subr.bf16.mxu0 0
          %1186 = vmatpush1.bf16.msra.mxu0 %v1155
          %1187 = vmatprep.subr.bf16.mxu0 0
          %1188 = vmatpush2.bf16.msra.mxu0 0
          %1189 = vmatprep.subr.bf16.mxu0 0
          %1190 = vmatpush2.bf16.msra.mxu0 0
          %1191 = vmatprep.subr.bf16.mxu0 0
          %1192 = vmatpush2.bf16.msra.mxu0 0
          %1193 = vmatprep.subr.bf16.mxu0 0
          %1194 = vmatpush2.bf16.msra.mxu0 0
          %1195 = vmatprep.subr.bf16.mxu0 0
          %1196 = vmatpush2.bf16.msra.mxu0 0
          %1197 = vmatprep.subr.bf16.mxu0 0
          %1198 = vmatpush2.bf16.msra.mxu0 0
          %1199 = vmatprep.subr.bf16.mxu0 0
          %1200 = vmatpush2.bf16.msra.mxu0 0
          %1201 = vmatprep.subr.bf16.mxu0 0
          %1202 = vmatpush2.bf16.msra.mxu0 0
          %1203 = vmatprep.mubr.bf16.mxu0 0
          %1204 = vmatmul.mubr.bf16.gmra.mxu0 %v1099
          %v1205 = vpop.f32.mrf.mxu0
          %v1206 = vadd.f32 %v1121, %v1205
          %v1207 = vpop.f32.mrf.mxu0
          %v1208 = vpop.f32.mrf.mxu0
          %v1209 = vadd.f32 %v1121, %v1208
          %v1210 = vpop.f32.mrf.mxu0
          %1211 = vdwg.mxu0
          %v1212 = vmax.f32 %v1206, 0.0
          %v1213 = vmax.f32 %v1209, 0.0
          %v1214 = vpack.c.bf16 %v1213, %v1212
          %v1215 = vld [vmem:[%s324] sm:$0xf]
          %v1216 = vld [vmem:[%s324 + $0x4] sm:$0xf]
          %v1217 = vld [vmem:[%s324 + $0x8] sm:$0xf]
          %v1218 = vld [vmem:[%s324 + $0xc] sm:$0xf]
          %v1219 = vld [vmem:[%s324 + $0x10] sm:$0xf]
          %v1220 = vld [vmem:[%s324 + $0x14] sm:$0xf]
          %v1221 = vld [vmem:[%s324 + $0x18] sm:$0xf]
          %v1222 = vld [vmem:[%s324 + $0x1c] sm:$0xf]
          %v1223 = vld [vmem:[%s324 + $0x20] sm:$0xf]
          %v1224 = vld [vmem:[%s324 + $0x24] sm:$0xf]
          %v1225 = vld [vmem:[%s324 + $0x28] sm:$0xf]
          %v1226 = vld [vmem:[%s324 + $0x2c] sm:$0xf]
          %v1227 = vld [vmem:[%s324 + $0x30] sm:$0xf]
          %v1228 = vld [vmem:[%s324 + $0x34] sm:$0xf]
          %v1229 = vld [vmem:[%s324 + $0x38] sm:$0xf]
          %v1230 = vld [vmem:[%s324 + $0x3c] sm:$0xf]
          %v1231 = vld [vmem:[%s366] sm:$0x1]
          %v1233 = vlaneseq
          %v1234 = vshrl.u32 %v1233, 7
          %v1235 = vsub.s32 0, %v1234
          %v1236 = vrot.slane %v1231, %v1235
          %v1254 = vunpack.c.l.b16 %v1215
          %v1255 = vunpack.c.l.b16 %v1216
          %v1256 = vunpack.c.l.b16 %v1217
          %v1257 = vunpack.c.l.b16 %v1218
          %v1258 = vunpack.c.l.b16 %v1219
          %v1259 = vunpack.c.l.b16 %v1220
          %v1260 = vunpack.c.l.b16 %v1221
          %v1261 = vunpack.c.l.b16 %v1222
          %v1262 = vunpack.c.l.b16 %v1223
          %v1263 = vunpack.c.l.b16 %v1224
          %v1264 = vunpack.c.l.b16 %v1225
          %v1265 = vunpack.c.l.b16 %v1226
          %v1266 = vunpack.c.l.b16 %v1227
          %v1267 = vunpack.c.l.b16 %v1228
          %v1268 = vunpack.c.l.b16 %v1229
          %v1269 = vunpack.c.l.b16 %v1230
          %v1270 = vpack.c.b16 %v1255, %v1254
          %v1271 = vpack.c.b16 %v1257, %v1256
          %v1272 = vpack.c.b16 %v1259, %v1258
          %v1273 = vpack.c.b16 %v1261, %v1260
          %v1274 = vpack.c.b16 %v1263, %v1262
          %v1275 = vpack.c.b16 %v1265, %v1264
          %v1276 = vpack.c.b16 %v1267, %v1266
          %v1277 = vpack.c.b16 %v1269, %v1268
          %1286 = vmatprep.subr.bf16.mxu0 0
          %1287 = vmatpush1.bf16.msra.mxu0 %v1277
          %1288 = vmatprep.subr.bf16.mxu0 0
          %1289 = vmatpush1.bf16.msra.mxu0 %v1276
          %1290 = vmatprep.subr.bf16.mxu0 0
          %1291 = vmatpush1.bf16.msra.mxu0 %v1275
          %1292 = vmatprep.subr.bf16.mxu0 0
          %1293 = vmatpush1.bf16.msra.mxu0 %v1274
          %1294 = vmatprep.subr.bf16.mxu0 0
          %1295 = vmatpush1.bf16.msra.mxu0 %v1273
          %1296 = vmatprep.subr.bf16.mxu0 0
          %1297 = vmatpush1.bf16.msra.mxu0 %v1272
          %1298 = vmatprep.subr.bf16.mxu0 0
          %1299 = vmatpush1.bf16.msra.mxu0 %v1271
          %1300 = vmatprep.subr.bf16.mxu0 0
          %1301 = vmatpush1.bf16.msra.mxu0 %v1270
          %1302 = vmatprep.subr.bf16.mxu0 0
          %1303 = vmatpush2.bf16.msra.mxu0 0
          %1304 = vmatprep.subr.bf16.mxu0 0
          %1305 = vmatpush2.bf16.msra.mxu0 0
          %1306 = vmatprep.subr.bf16.mxu0 0
          %1307 = vmatpush2.bf16.msra.mxu0 0
          %1308 = vmatprep.subr.bf16.mxu0 0
          %1309 = vmatpush2.bf16.msra.mxu0 0
          %1310 = vmatprep.subr.bf16.mxu0 0
          %1311 = vmatpush2.bf16.msra.mxu0 0
          %1312 = vmatprep.subr.bf16.mxu0 0
          %1313 = vmatpush2.bf16.msra.mxu0 0
          %1314 = vmatprep.subr.bf16.mxu0 0
          %1315 = vmatpush2.bf16.msra.mxu0 0
          %1316 = vmatprep.subr.bf16.mxu0 0
          %1317 = vmatpush2.bf16.msra.mxu0 0
          %1318 = vmatprep.mubr.bf16.mxu0 0
          %1319 = vmatmul.mubr.bf16.gmra.mxu0 %v1214
          %v1320 = vpop.f32.mrf.mxu0
          %v1321 = vadd.f32 %v1236, %v1320
          %v1322 = vpop.f32.mrf.mxu0
          %v1323 = vpop.f32.mrf.mxu0
          %v1324 = vadd.f32 %v1236, %v1323
          %v1325 = vpop.f32.mrf.mxu0
          %1326 = vdwg.mxu0
          %v1327 = vmax.f32 %v1321, 0.0
          %v1328 = vmax.f32 %v1324, 0.0
          %s1329 = scalar_lea.vmem [#allocation2], 16
          %1330 = vst [vmem:[%s1329] sm:$0xff] %v1327
          %1331 = vst [vmem:[%s1329 + $0x8] sm:$0xff] %v1328
        $region110: #{tpu_custom_call.1} parent=47 // pred_fallthru
          _
        %p1332 = pnand %p368, %p785
        %p1333 = pneg %p1332
        // Predicated region
        $region111: #{tpu_custom_call.1} parent=47 // pred_check
          _
        $region112: #{tpu_custom_call.1} parent=47 // pred_check_branch
          %1335 = sbr.rel (%p1332) target = $region114
        $region113: #{tpu_custom_call.1} parent=47 // pred_region
          %v1336 = vld [vmem:[#allocation3] sm:$0xff]
          %v1337 = vld [vmem:[#allocation3 + $0x8] sm:$0xff]
          %v1338 = vpack.c.bf16 %v1337, %v1336
          %v1339 = vld [vmem:[%s315] sm:$0xf]
          %v1340 = vld [vmem:[%s315 + $0x4] sm:$0xf]
          %v1341 = vld [vmem:[%s315 + $0x8] sm:$0xf]
          %v1342 = vld [vmem:[%s315 + $0xc] sm:$0xf]
          %v1343 = vld [vmem:[%s315 + $0x10] sm:$0xf]
          %v1344 = vld [vmem:[%s315 + $0x14] sm:$0xf]
          %v1345 = vld [vmem:[%s315 + $0x18] sm:$0xf]
          %v1346 = vld [vmem:[%s315 + $0x1c] sm:$0xf]
          %v1347 = vld [vmem:[%s315 + $0x20] sm:$0xf]
          %v1348 = vld [vmem:[%s315 + $0x24] sm:$0xf]
          %v1349 = vld [vmem:[%s315 + $0x28] sm:$0xf]
          %v1350 = vld [vmem:[%s315 + $0x2c] sm:$0xf]
          %v1351 = vld [vmem:[%s315 + $0x30] sm:$0xf]
          %v1352 = vld [vmem:[%s315 + $0x34] sm:$0xf]
          %v1353 = vld [vmem:[%s315 + $0x38] sm:$0xf]
          %v1354 = vld [vmem:[%s315 + $0x3c] sm:$0xf]
          %v1355 = vld [vmem:[%s363] sm:$0x1]
          %v1357 = vlaneseq
          %v1358 = vshrl.u32 %v1357, 7
          %v1359 = vsub.s32 0, %v1358
          %v1360 = vrot.slane %v1355, %v1359
          %v1378 = vunpack.c.l.b16 %v1339
          %v1379 = vunpack.c.l.b16 %v1340
          %v1380 = vunpack.c.l.b16 %v1341
          %v1381 = vunpack.c.l.b16 %v1342
          %v1382 = vunpack.c.l.b16 %v1343
          %v1383 = vunpack.c.l.b16 %v1344
          %v1384 = vunpack.c.l.b16 %v1345
          %v1385 = vunpack.c.l.b16 %v1346
          %v1386 = vunpack.c.l.b16 %v1347
          %v1387 = vunpack.c.l.b16 %v1348
          %v1388 = vunpack.c.l.b16 %v1349
          %v1389 = vunpack.c.l.b16 %v1350
          %v1390 = vunpack.c.l.b16 %v1351
          %v1391 = vunpack.c.l.b16 %v1352
          %v1392 = vunpack.c.l.b16 %v1353
          %v1393 = vunpack.c.l.b16 %v1354
          %v1394 = vpack.c.b16 %v1379, %v1378
          %v1395 = vpack.c.b16 %v1381, %v1380
          %v1396 = vpack.c.b16 %v1383, %v1382
          %v1397 = vpack.c.b16 %v1385, %v1384
          %v1398 = vpack.c.b16 %v1387, %v1386
          %v1399 = vpack.c.b16 %v1389, %v1388
          %v1400 = vpack.c.b16 %v1391, %v1390
          %v1401 = vpack.c.b16 %v1393, %v1392
          %1410 = vmatprep.subr.bf16.mxu0 0
          %1411 = vmatpush1.bf16.msra.mxu0 %v1401
          %1412 = vmatprep.subr.bf16.mxu0 0
          %1413 = vmatpush1.bf16.msra.mxu0 %v1400
          %1414 = vmatprep.subr.bf16.mxu0 0
          %1415 = vmatpush1.bf16.msra.mxu0 %v1399
          %1416 = vmatprep.subr.bf16.mxu0 0
          %1417 = vmatpush1.bf16.msra.mxu0 %v1398
          %1418 = vmatprep.subr.bf16.mxu0 0
          %1419 = vmatpush1.bf16.msra.mxu0 %v1397
          %1420 = vmatprep.subr.bf16.mxu0 0
          %1421 = vmatpush1.bf16.msra.mxu0 %v1396
          %1422 = vmatprep.subr.bf16.mxu0 0
          %1423 = vmatpush1.bf16.msra.mxu0 %v1395
          %1424 = vmatprep.subr.bf16.mxu0 0
          %1425 = vmatpush1.bf16.msra.mxu0 %v1394
          %1426 = vmatprep.subr.bf16.mxu0 0
          %1427 = vmatpush2.bf16.msra.mxu0 0
          %1428 = vmatprep.subr.bf16.mxu0 0
          %1429 = vmatpush2.bf16.msra.mxu0 0
          %1430 = vmatprep.subr.bf16.mxu0 0
          %1431 = vmatpush2.bf16.msra.mxu0 0
          %1432 = vmatprep.subr.bf16.mxu0 0
          %1433 = vmatpush2.bf16.msra.mxu0 0
          %1434 = vmatprep.subr.bf16.mxu0 0
          %1435 = vmatpush2.bf16.msra.mxu0 0
          %1436 = vmatprep.subr.bf16.mxu0 0
          %1437 = vmatpush2.bf16.msra.mxu0 0
          %1438 = vmatprep.subr.bf16.mxu0 0
          %1439 = vmatpush2.bf16.msra.mxu0 0
          %1440 = vmatprep.subr.bf16.mxu0 0
          %1441 = vmatpush2.bf16.msra.mxu0 0
          %1442 = vmatprep.mubr.bf16.mxu0 0
          %1443 = vmatmul.mubr.bf16.gmra.mxu0 %v1338
          %v1444 = vpop.f32.mrf.mxu0
          %v1445 = vadd.f32 %v1360, %v1444
          %v1446 = vpop.f32.mrf.mxu0
          %v1447 = vpop.f32.mrf.mxu0
          %v1448 = vadd.f32 %v1360, %v1447
          %v1449 = vpop.f32.mrf.mxu0
          %1450 = vdwg.mxu0
          %v1451 = vmax.f32 %v1445, 0.0
          %v1452 = vmax.f32 %v1448, 0.0
          %v1453 = vpack.c.bf16 %v1452, %v1451
          %v1454 = vld [vmem:[%s324] sm:$0xf]
          %v1455 = vld [vmem:[%s324 + $0x4] sm:$0xf]
          %v1456 = vld [vmem:[%s324 + $0x8] sm:$0xf]
          %v1457 = vld [vmem:[%s324 + $0xc] sm:$0xf]
          %v1458 = vld [vmem:[%s324 + $0x10] sm:$0xf]
          %v1459 = vld [vmem:[%s324 + $0x14] sm:$0xf]
          %v1460 = vld [vmem:[%s324 + $0x18] sm:$0xf]
          %v1461 = vld [vmem:[%s324 + $0x1c] sm:$0xf]
          %v1462 = vld [vmem:[%s324 + $0x20] sm:$0xf]
          %v1463 = vld [vmem:[%s324 + $0x24] sm:$0xf]
          %v1464 = vld [vmem:[%s324 + $0x28] sm:$0xf]
          %v1465 = vld [vmem:[%s324 + $0x2c] sm:$0xf]
          %v1466 = vld [vmem:[%s324 + $0x30] sm:$0xf]
          %v1467 = vld [vmem:[%s324 + $0x34] sm:$0xf]
          %v1468 = vld [vmem:[%s324 + $0x38] sm:$0xf]
          %v1469 = vld [vmem:[%s324 + $0x3c] sm:$0xf]
          %v1470 = vld [vmem:[%s366] sm:$0x1]
          %v1472 = vlaneseq
          %v1473 = vshrl.u32 %v1472, 7
          %v1474 = vsub.s32 0, %v1473
          %v1475 = vrot.slane %v1470, %v1474
          %v1493 = vunpack.c.l.b16 %v1454
          %v1494 = vunpack.c.l.b16 %v1455
          %v1495 = vunpack.c.l.b16 %v1456
          %v1496 = vunpack.c.l.b16 %v1457
          %v1497 = vunpack.c.l.b16 %v1458
          %v1498 = vunpack.c.l.b16 %v1459
          %v1499 = vunpack.c.l.b16 %v1460
          %v1500 = vunpack.c.l.b16 %v1461
          %v1501 = vunpack.c.l.b16 %v1462
          %v1502 = vunpack.c.l.b16 %v1463
          %v1503 = vunpack.c.l.b16 %v1464
          %v1504 = vunpack.c.l.b16 %v1465
          %v1505 = vunpack.c.l.b16 %v1466
          %v1506 = vunpack.c.l.b16 %v1467
          %v1507 = vunpack.c.l.b16 %v1468
          %v1508 = vunpack.c.l.b16 %v1469
          %v1509 = vpack.c.b16 %v1494, %v1493
          %v1510 = vpack.c.b16 %v1496, %v1495
          %v1511 = vpack.c.b16 %v1498, %v1497
          %v1512 = vpack.c.b16 %v1500, %v1499
          %v1513 = vpack.c.b16 %v1502, %v1501
          %v1514 = vpack.c.b16 %v1504, %v1503
          %v1515 = vpack.c.b16 %v1506, %v1505
          %v1516 = vpack.c.b16 %v1508, %v1507
          %1525 = vmatprep.subr.bf16.mxu0 0
          %1526 = vmatpush1.bf16.msra.mxu0 %v1516
          %1527 = vmatprep.subr.bf16.mxu0 0
          %1528 = vmatpush1.bf16.msra.mxu0 %v1515
          %1529 = vmatprep.subr.bf16.mxu0 0
          %1530 = vmatpush1.bf16.msra.mxu0 %v1514
          %1531 = vmatprep.subr.bf16.mxu0 0
          %1532 = vmatpush1.bf16.msra.mxu0 %v1513
          %1533 = vmatprep.subr.bf16.mxu0 0
          %1534 = vmatpush1.bf16.msra.mxu0 %v1512
          %1535 = vmatprep.subr.bf16.mxu0 0
          %1536 = vmatpush1.bf16.msra.mxu0 %v1511
          %1537 = vmatprep.subr.bf16.mxu0 0
          %1538 = vmatpush1.bf16.msra.mxu0 %v1510
          %1539 = vmatprep.subr.bf16.mxu0 0
          %1540 = vmatpush1.bf16.msra.mxu0 %v1509
          %1541 = vmatprep.subr.bf16.mxu0 0
          %1542 = vmatpush2.bf16.msra.mxu0 0
          %1543 = vmatprep.subr.bf16.mxu0 0
          %1544 = vmatpush2.bf16.msra.mxu0 0
          %1545 = vmatprep.subr.bf16.mxu0 0
          %1546 = vmatpush2.bf16.msra.mxu0 0
          %1547 = vmatprep.subr.bf16.mxu0 0
          %1548 = vmatpush2.bf16.msra.mxu0 0
          %1549 = vmatprep.subr.bf16.mxu0 0
          %1550 = vmatpush2.bf16.msra.mxu0 0
          %1551 = vmatprep.subr.bf16.mxu0 0
          %1552 = vmatpush2.bf16.msra.mxu0 0
          %1553 = vmatprep.subr.bf16.mxu0 0
          %1554 = vmatpush2.bf16.msra.mxu0 0
          %1555 = vmatprep.subr.bf16.mxu0 0
          %1556 = vmatpush2.bf16.msra.mxu0 0
          %1557 = vmatprep.mubr.bf16.mxu0 0
          %1558 = vmatmul.mubr.bf16.gmra.mxu0 %v1453
          %v1559 = vpop.f32.mrf.mxu0
          %v1560 = vadd.f32 %v1475, %v1559
          %v1561 = vpop.f32.mrf.mxu0
          %v1562 = vpop.f32.mrf.mxu0
          %v1563 = vadd.f32 %v1475, %v1562
          %v1564 = vpop.f32.mrf.mxu0
          %1565 = vdwg.mxu0
          %v1566 = vmax.f32 %v1560, 0.0
          %v1567 = vmax.f32 %v1563, 0.0
          %1568 = vst [vmem:[#allocation2] sm:$0xff] %v1566
          %1569 = vst [vmem:[#allocation2 + $0x8] sm:$0xff] %v1567
        $region114: #{tpu_custom_call.1} parent=47 // pred_fallthru
          _
        %p1570 = scmp.eq.s32.totalorder %s31, 3
        %p1571 = pnand %p368, %p1570
        %p1572 = pneg %p1571
        // Predicated region
        $region115: #{tpu_custom_call.1} parent=47 // pred_check
          _
        $region116: #{tpu_custom_call.1} parent=47 // pred_check_branch
          %1574 = sbr.rel (%p1571) target = $region118
        $region117: #{tpu_custom_call.1} parent=47 // pred_region
          %v1575 = vld [vmem:[#allocation2] sm:$0xff]
          %v1576 = vld [vmem:[#allocation2 + $0x8] sm:$0xff]
          %v1577 = vld [vmem:[%s6] sm:$0x3]
          %vm1578 = vcmask 130048
          %v1580 = vsel %vm1578, %v1577, 0
          %1582 = vmatprep.subr.mxu0 0.0
          %1583 = vmatpush1.msra.mxu0 0.0
          %1584 = vmatprep.subr.mxu0 0.0
          %1585 = vmatpush1.msra.mxu0 0.0
          %1586 = vmatprep.subr.mxu0 0.0
          %1587 = vmatpush1.msra.mxu0 0.0
          %1588 = vmatprep.subr.mxu0 0.0
          %1589 = vmatpush1.msra.mxu0 0.0
          %1590 = vmatprep.subr.mxu0 0.0
          %1591 = vmatpush1.msra.mxu0 0.0
          %1592 = vmatprep.subr.mxu0 0.0
          %1593 = vmatpush1.msra.mxu0 0.0
          %1594 = vmatprep.subr.mxu0 0.0
          %1595 = vmatpush1.msra.mxu0 0.0
          %1596 = vmatprep.subr.mxu0 0.0
          %1597 = vmatpush1.msra.mxu0 0.0
          %1598 = vmatprep.subr.mxu0 0.0
          %1599 = vmatpush1.msra.mxu0 0.0
          %1600 = vmatprep.subr.mxu0 0.0
          %1601 = vmatpush1.msra.mxu0 0.0
          %1602 = vmatprep.subr.mxu0 0.0
          %1603 = vmatpush1.msra.mxu0 0.0
          %1604 = vmatprep.subr.mxu0 0.0
          %1605 = vmatpush1.msra.mxu0 0.0
          %1606 = vmatprep.subr.mxu0 0.0
          %1607 = vmatpush1.msra.mxu0 0.0
          %1608 = vmatprep.subr.mxu0 0.0
          %1609 = vmatpush1.msra.mxu0 0.0
          %1610 = vmatprep.subr.mxu0 0.0
          %1611 = vmatpush1.msra.mxu0 %v1576
          %1612 = vmatprep.subr.mxu0 0.0
          %1613 = vmatpush1.msra.mxu0 %v1575
          %1614 = vmatprep.subr.mxu0 0.0
          %1615 = vmatpush2.msra.mxu0 0.0
          %1616 = vmatprep.subr.mxu0 0.0
          %1617 = vmatpush2.msra.mxu0 0.0
          %1618 = vmatprep.subr.mxu0 0.0
          %1619 = vmatpush2.msra.mxu0 0.0
          %1620 = vmatprep.subr.mxu0 0.0
          %1621 = vmatpush2.msra.mxu0 0.0
          %1622 = vmatprep.subr.mxu0 0.0
          %1623 = vmatpush2.msra.mxu0 0.0
          %1624 = vmatprep.subr.mxu0 0.0
          %1625 = vmatpush2.msra.mxu0 0.0
          %1626 = vmatprep.subr.mxu0 0.0
          %1627 = vmatpush2.msra.mxu0 0.0
          %1628 = vmatprep.subr.mxu0 0.0
          %1629 = vmatpush2.msra.mxu0 0.0
          %1630 = vmatprep.subr.mxu0 0.0
          %1631 = vmatpush2.msra.mxu0 0.0
          %1632 = vmatprep.subr.mxu0 0.0
          %1633 = vmatpush2.msra.mxu0 0.0
          %1634 = vmatprep.subr.mxu0 0.0
          %1635 = vmatpush2.msra.mxu0 0.0
          %1636 = vmatprep.subr.mxu0 0.0
          %1637 = vmatpush2.msra.mxu0 0.0
          %1638 = vmatprep.subr.mxu0 0.0
          %1639 = vmatpush2.msra.mxu0 0.0
          %1640 = vmatprep.subr.mxu0 0.0
          %1641 = vmatpush2.msra.mxu0 0.0
          %1642 = vmatprep.subr.mxu0 0.0
          %1643 = vmatpush2.msra.mxu0 0.0
          %1644 = vmatprep.subr.mxu0 0.0
          %1645 = vmatpush2.msra.mxu0 0.0
          %1646 = vmatprep.mubr.f32.mxu0 0.0
          %1647 = vmatmul.mubr.f32.gmra.mxu0 %v1580
          %v1648 = vpop.f32.mrf.mxu0
          %v1649 = vadd.f32 0.0, %v1648
          %v1650 = vpop.f32.mrf.mxu0
          %1651 = vdwg.mxu0
          %v1652 = vld [vmem:[%s7] sm:$0xff]
          %v1653 = vld [vmem:[%s7 + $0x8] sm:$0xff]
          %v1654 = vld [vmem:[%s7 + $0x10] sm:$0xff]
          %v1655 = vld [vmem:[%s7 + $0x18] sm:$0xff]
          %v1656 = vld [vmem:[%s7 + $0x20] sm:$0xff]
          %v1657 = vld [vmem:[%s7 + $0x28] sm:$0xff]
          %v1658 = vld [vmem:[%s7 + $0x30] sm:$0xff]
          %v1659 = vld [vmem:[%s7 + $0x38] sm:$0xff]
          %v1660 = vld [vmem:[%s7 + $0x40] sm:$0xff]
          %v1661 = vld [vmem:[%s7 + $0x48] sm:$0xff]
          %v1662 = vld [vmem:[%s7 + $0x50] sm:$0xff]
          %v1663 = vld [vmem:[%s7 + $0x58] sm:$0xff]
          %v1664 = vld [vmem:[%s7 + $0x60] sm:$0xff]
          %v1665 = vld [vmem:[%s7 + $0x68] sm:$0xff]
          %v1666 = vld [vmem:[%s7 + $0x70] sm:$0xff]
          %v1667 = vld [vmem:[%s7 + $0x78] sm:$0xff]
          %v1668 = vld [vmem:[%s8] sm:$0x1]
          %v1670 = vlaneseq
          %v1671 = vshrl.u32 %v1670, 7
          %v1672 = vsub.s32 0, %v1671
          %v1673 = vrot.slane %v1668, %v1672
          %1675 = vmatprep.subr.mxu0 0.0
          %1676 = vmatpush1.msra.mxu0 %v1667
          %1677 = vmatprep.subr.mxu0 0.0
          %1678 = vmatpush1.msra.mxu0 %v1666
          %1679 = vmatprep.subr.mxu0 0.0
          %1680 = vmatpush1.msra.mxu0 %v1665
          %1681 = vmatprep.subr.mxu0 0.0
          %1682 = vmatpush1.msra.mxu0 %v1664
          %1683 = vmatprep.subr.mxu0 0.0
          %1684 = vmatpush1.msra.mxu0 %v1663
          %1685 = vmatprep.subr.mxu0 0.0
          %1686 = vmatpush1.msra.mxu0 %v1662
          %1687 = vmatprep.subr.mxu0 0.0
          %1688 = vmatpush1.msra.mxu0 %v1661
          %1689 = vmatprep.subr.mxu0 0.0
          %1690 = vmatpush1.msra.mxu0 %v1660
          %1691 = vmatprep.subr.mxu0 0.0
          %1692 = vmatpush1.msra.mxu0 %v1659
          %1693 = vmatprep.subr.mxu0 0.0
          %1694 = vmatpush1.msra.mxu0 %v1658
          %1695 = vmatprep.subr.mxu0 0.0
          %1696 = vmatpush1.msra.mxu0 %v1657
          %1697 = vmatprep.subr.mxu0 0.0
          %1698 = vmatpush1.msra.mxu0 %v1656
          %1699 = vmatprep.subr.mxu0 0.0
          %1700 = vmatpush1.msra.mxu0 %v1655
          %1701 = vmatprep.subr.mxu0 0.0
          %1702 = vmatpush1.msra.mxu0 %v1654
          %1703 = vmatprep.subr.mxu0 0.0
          %1704 = vmatpush1.msra.mxu0 %v1653
          %1705 = vmatprep.subr.mxu0 0.0
          %1706 = vmatpush1.msra.mxu0 %v1652
          %1707 = vmatprep.subr.mxu0 0.0
          %1708 = vmatpush2.msra.mxu0 0.0
          %1709 = vmatprep.subr.mxu0 0.0
          %1710 = vmatpush2.msra.mxu0 0.0
          %1711 = vmatprep.subr.mxu0 0.0
          %1712 = vmatpush2.msra.mxu0 0.0
          %1713 = vmatprep.subr.mxu0 0.0
          %1714 = vmatpush2.msra.mxu0 0.0
          %1715 = vmatprep.subr.mxu0 0.0
          %1716 = vmatpush2.msra.mxu0 0.0
          %1717 = vmatprep.subr.mxu0 0.0
          %1718 = vmatpush2.msra.mxu0 0.0
          %1719 = vmatprep.subr.mxu0 0.0
          %1720 = vmatpush2.msra.mxu0 0.0
          %1721 = vmatprep.subr.mxu0 0.0
          %1722 = vmatpush2.msra.mxu0 0.0
          %1723 = vmatprep.subr.mxu0 0.0
          %1724 = vmatpush2.msra.mxu0 0.0
          %1725 = vmatprep.subr.mxu0 0.0
          %1726 = vmatpush2.msra.mxu0 0.0
          %1727 = vmatprep.subr.mxu0 0.0
          %1728 = vmatpush2.msra.mxu0 0.0
          %1729 = vmatprep.subr.mxu0 0.0
          %1730 = vmatpush2.msra.mxu0 0.0
          %1731 = vmatprep.subr.mxu0 0.0
          %1732 = vmatpush2.msra.mxu0 0.0
          %1733 = vmatprep.subr.mxu0 0.0
          %1734 = vmatpush2.msra.mxu0 0.0
          %1735 = vmatprep.subr.mxu0 0.0
          %1736 = vmatpush2.msra.mxu0 0.0
          %1737 = vmatprep.subr.mxu0 0.0
          %1738 = vmatpush2.msra.mxu0 0.0
          %1739 = vmatprep.mubr.f32.mxu0 0.0
          %1740 = vmatmul.mubr.f32.gmra.mxu0 %v1649
          %v1741 = vpop.f32.mrf.mxu0
          %v1742 = vadd.f32 %v1673, %v1741
          %v1743 = vpop.f32.mrf.mxu0
          %1744 = vdwg.mxu0
          %vm1745 = vcmask 17408
          %1746 = vst.msk [vmem:[#allocation11] sm:$0x3] %vm1745, %v1742
        $region118: #{tpu_custom_call.1} parent=47 // pred_fallthru
          _
        // Predicated region
        $region119: #{tpu_custom_call.1} parent=47 // pred_check
          %p1747 = pneg %p219
        $region120: #{tpu_custom_call.1} parent=47 // pred_check_branch
          %1749 = sbr.rel (%p1747) target = $region122
        $region121: #{tpu_custom_call.1} parent=47 // pred_region
          %s1751 = ssub.s32 32, 32
          %1752 = vsyncadd [#allocation8], %s1751
          %s1754 = sshll.u32 [#allocation11], 4
          %s1755 = int_to_ptr.vmem [resolvable:$true] %s1754
          %1757 = dma.vmem_to_hbm [thread:$0]  %s1755, 32, %s9, [#allocation8]
        $region122: #{tpu_custom_call.1} parent=47 // pred_fallthru
          _
        // Predicated region
        $region123: #{tpu_custom_call.1} parent=47 // pred_check
          %p1758 = pneg %p219
        $region124: #{tpu_custom_call.1} parent=47 // pred_check_branch
          %1760 = sbr.rel (%p1758) target = $region126
        $region125: #{tpu_custom_call.1} parent=47 // pred_region
          %1761 = dma.done [#allocation8], 32
        $region126: #{tpu_custom_call.1} parent=47 // pred_fallthru
          _
      $region48: #{tpu_custom_call.1} parent=5 // pred_fallthru
        _
      %p1762 = scmp.le.s32.totalorder 2, %s22
      // Predicated region
      $region127: #{tpu_custom_call.1} parent=5 // pred_check
        %p1763 = pneg %p1762
      $region128: #{tpu_custom_call.1} parent=5 // pred_check_branch
        %1765 = sbr.rel (%p1763) target = $region130
      $region129: #{tpu_custom_call.1} parent=5 // pred_region
        %s1766 = ssub.s32 %s22, 2
      $region130: #{tpu_custom_call.1} parent=5 // pred_fallthru
        _
    $region6: #{tpu_custom_call.1} parent=1 // loop_footer
      %s26 = sadd.s32 1, %s22
    $region7: #{tpu_custom_call.1} parent=1 // loop_footer_branch
      %21 = sbr.rel target = $region3
    $region8: #{tpu_custom_call.1} parent=1 // loop_exit
      _
    %1767 = vsyncpa [#allocation7], 1
    %s1768 = scalar_lea.sflag [#allocation7], 1
    %1769 = vsyncpa %s1768, 1
    %1770 = vsyncpa [#allocation10], 1
    %s1771 = scalar_lea.sflag [#allocation10], 1
    %1772 = vsyncpa %s1771, 1
    %1773 = vsyncpa [#allocation8], 1
    %s1774 = scalar_lea.sflag [#allocation8], 1
    %1775 = vsyncpa %s1774, 1
  %1776 = vsyncmov [#allocation5]
  %s1777 = vpop.sfrf %1776
  %p1778 = scmp.eq.s32.totalorder %s1777, 0
  %p1779 = pneg %p1778
  %1781 = shalt.err (%p1779)
  %s1782 = scalar_lea.sflag [#allocation5], 1
  %1783 = vsyncmov %s1782
  %s1784 = vpop.sfrf %1783
  %p1785 = scmp.eq.s32.totalorder %s1784, 0
  %p1786 = pneg %p1785
  %1788 = shalt.err (%p1786)

</llo_original>
